<compile_context>
chip_gen: v6e
topology: v6e:2x2x1
jax: 0.10.0
libtpu: 0.0.40
codegen_flags: <defaults>
</compile_context>

<pallas_src>
import functools

import jax
import jax.numpy as jnp
from jax.experimental import pallas as pl
from jax.experimental.pallas import tpu as pltpu


def mlp_kernel(seed_ref, x_ref, w1_ref, b1_ref, w2_ref, b2_ref, o_ref, *,
               dropout_p, train, single_k, hidden_span):
    # x_ref : (tm, n_pad) bf16      w1_ref: (n_pad, th) bf16   b1_ref: (1, th) f32
    # w2_ref: (th, n_pad) bf16      b2_ref: (1, n_pad) f32
    # o_ref : (tm, n_pad) out dtype (f32 when the hidden axis is chunked)
    h = jnp.dot(x_ref[...], w1_ref[...], preferred_element_type=jnp.float32)
    h = jnp.maximum(h + b1_ref[...], 0.0)

    if train and dropout_p > 0.0:
        # Inverted dropout.  Counter-based hash ("lowbias32") of the global
        # element index + seed -> uniform u32; compare against p * 2^32.
        # Pure VPU integer ops: lowers on TPU Mosaic and in interpret mode,
        # and the mask is independent of the (tm, th) tiling.
        tm, th = h.shape
        row0 = pl.program_id(0) * tm
        col0 = pl.program_id(1) * th
        rows = jax.lax.broadcasted_iota(jnp.int32, (tm, th), 0) + row0
        cols = jax.lax.broadcasted_iota(jnp.int32, (tm, th), 1) + col0
        u = (rows * hidden_span + cols).astype(jnp.uint32)
        u = u + seed_ref[0].astype(jnp.uint32) * jnp.uint32(2654435761)
        u = u ^ (u >> 16)
        u = u * jnp.uint32(0x7FEB352D)
        u = u ^ (u >> 15)
        u = u * jnp.uint32(0x846CA68B)
        u = u ^ (u >> 16)
        thresh = jnp.uint32(min(int(dropout_p * 4294967296.0), 0xFFFFFFFF))
        h = jnp.where(u < thresh, 0.0, h * (1.0 / (1.0 - dropout_p)))

    contrib = jnp.dot(h.astype(jnp.bfloat16), w2_ref[...],
                      preferred_element_type=jnp.float32)

    if single_k:
        # Weights fully resident: one hidden chunk, write the result directly.
        o_ref[...] = (contrib + b2_ref[...]).astype(o_ref.dtype)
    else:
        # Hidden-chunked reduction: accumulate into the resident output tile
        # (its block index is constant over k), add the bias on the last step.
        k = pl.program_id(1)

        @pl.when(k == 0)
        def _init():
            o_ref[...] = jnp.zeros_like(o_ref)

        o_ref[...] += contrib

        @pl.when(k == pl.num_programs(1) - 1)
        def _finalize():
            o_ref[...] = o_ref[...] + b2_ref[...]


def _round_up(v, m):
    return (v + m - 1) // m * m


def _pad_cast(a, shape, dtype):
    """Cast to dtype and zero-pad up to `shape`; no copy if already matching."""
    a = a.astype(dtype)
    if tuple(a.shape) == tuple(shape):
        return a
    out = jnp.zeros(shape, dtype)
    return out.at[tuple(slice(0, s) for s in a.shape)].set(a)


def _vmem_capacity_bytes():
    try:
        return int(getattr(pltpu.get_tpu_info(), "vmem_capacity_bytes", 64 << 20))
    except Exception:
        return 64 << 20  # conservative (v7x per-TensorCore); also interpret-mode path


def mlp_forward(x, w1, b1, w2, b2, *, dropout_p=0.1, train=False, seed=0,
                hidden_chunk=None):
    """Fused Linear -> ReLU -> Dropout -> Linear on TPU via Pallas.

    Weights stored pre-transposed: w1 (n_units, hidden), w2 (hidden, n_units).
    NOTE: for repeated calls at fixed shapes, pre-padding/casting the weights
    once outside this function avoids an extra HBM pass per call.
    """
    orig_shape = x.shape
    n_units = orig_shape[-1]
    hidden = w1.shape[1]
    b1 = b1.reshape(1, -1)
    b2 = b2.reshape(1, -1)
    assert w1.shape[0] == n_units and w2.shape == (hidden, n_units)
    assert b1.shape[1] == hidden and b2.shape[1] == n_units

    xm = x.reshape(-1, n_units)
    M = xm.shape[0]

    # ---- generation-aware budgets -------------------------------------------
    cap = _vmem_capacity_bytes()
    small_vmem = cap <= (64 << 20)          # v7x-class: 64 MiB VMEM, 2 TCs/chip
    resident_cap = (24 << 20) if small_vmem else (40 << 20)

    # ---- lane-dense padding: feature dims -> multiples of 128 ---------------
    # (n_units << 128 is inherently padding-bound on the MXU; accepted here.)
    n_pad = _round_up(n_units, 128)
    h_pad = _round_up(hidden, 128)

    # ---- row tile: big tiles amortize per-step overhead; on v7x make sure the
    # "parallel" rows axis has >= 2 blocks so both TensorCores get work.
    tm_max = 512 if small_vmem else 1024
    tm = min(tm_max, _round_up(M, 8))
    if small_vmem and M > 8 and pl.cdiv(M, tm) == 1:
        tm = _round_up(pl.cdiv(M, 2), 8)
    grid_m = pl.cdiv(M, tm)
    m_pad = grid_m * tm

    # ---- hidden chunking: resident when small enough, else stream slabs -----
    if hidden_chunk is None:
        w_bytes_bf16 = 2 * n_pad * h_pad * 2
        hidden_chunk = h_pad if w_bytes_bf16 <= resident_cap else (
            512 if small_vmem else 1024)
    th = min(_round_up(hidden_chunk, 128), h_pad)
    h_tot = _round_up(h_pad, th)            # pad hidden up to a multiple of th
    nk = h_tot // th
    single_k = (nk == 1)

    # ---- pad / cast operands (bf16 x & weights, f32 biases) ------------------
    xp = _pad_cast(xm, (m_pad, n_pad), jnp.bfloat16)
    w1p = _pad_cast(w1, (n_pad, h_tot), jnp.bfloat16)
    b1p = _pad_cast(b1, (1, h_tot), jnp.float32)
    w2p = _pad_cast(w2, (h_tot, n_pad), jnp.bfloat16)
    b2p = _pad_cast(b2, (1, n_pad), jnp.float32)

    # f32 output when accumulating across hidden chunks; else the input dtype.
    out_dtype = x.dtype if single_k else jnp.float32
    out_bytes = jnp.dtype(out_dtype).itemsize

    def _spec(shape, imap, constant):
        # Constant-index operands don't need double-buffering: halve their VMEM.
        if constant:
            return pl.BlockSpec(shape, imap, pipeline_mode=pl.Buffered(1))
        return pl.BlockSpec(shape, imap)

    in_specs = [
        pl.BlockSpec((tm, n_pad), lambda i, k, s: (i, 0)),             # x
        _spec((n_pad, th), lambda i, k, s: (0, k), single_k),          # w1
        _spec((1, th), lambda i, k, s: (0, k), single_k),              # b1
        _spec((th, n_pad), lambda i, k, s: (k, 0), single_k),          # w2
        _spec((1, n_pad), lambda i, k, s: (0, 0), True),               # b2
    ]
    out_specs = pl.BlockSpec((tm, n_pad), lambda i, k, s: (i, 0))

    # ---- explicit VMEM budget, capped at ~75% of physical VMEM ---------------
    wbuf = 1 if single_k else 2
    est = (wbuf * 2 * n_pad * th * 2                 # bf16 weight slabs
           + wbuf * th * 4 + n_pad * 4               # biases
           + 2 * tm * n_pad * 2                      # x tiles (bf16, double-buffered)
           + 2 * tm * n_pad * out_bytes              # output tiles
           + tm * th * (4 + 2)                       # h (f32) + bf16 copy for matmul 2
           + (tm * th * 4 if (train and dropout_p > 0.0) else 0))   # dropout hash
    vmem_limit = min(max(int(est * 1.5) + (8 << 20), 32 << 20), cap * 3 // 4)

    flops = 4 * m_pad * n_pad * h_tot                # two matmuls: 2*M*N*K each
    bytes_accessed = (xp.size * 2 + w1p.size * 2 + w2p.size * 2
                      + b1p.size * 4 + b2p.size * 4 + m_pad * n_pad * out_bytes)
    cost = pl.CostEstimate(flops=flops, transcendentals=0,
                           bytes_accessed=bytes_accessed)

    kernel = functools.partial(mlp_kernel, dropout_p=float(dropout_p),
                               train=bool(train), single_k=single_k,
                               hidden_span=int(h_tot))

    out = pl.pallas_call(
        kernel,
        out_shape=jax.ShapeDtypeStruct((m_pad, n_pad), out_dtype),
        grid_spec=pltpu.PrefetchScalarGridSpec(
            num_scalar_prefetch=1,                   # dropout seed lives in SMEM
            grid=(grid_m, nk),                       # rows parallel, hidden reduction last
            in_specs=in_specs,
            out_specs=out_specs),
        compiler_params=pltpu.CompilerParams(
            dimension_semantics=("parallel", "arbitrary"),
            vmem_limit_bytes=vmem_limit),
        cost_estimate=cost,
    )(jnp.array([seed], dtype=jnp.int32), xp, w1p, b1p, w2p, b2p)

    out = out[:M, :n_units]
    return out.reshape(orig_shape).astype(x.dtype)


def init_mlp_params(key, n_units, hidden=2048, dtype=jnp.float32):
    """nn.Linear-style init: U(-1/sqrt(fan_in), 1/sqrt(fan_in)); weights stored (in, out)."""
    k1, k2, k3, k4 = jax.random.split(key, 4)
    bound1 = 1.0 / (n_units ** 0.5)
    bound2 = 1.0 / (hidden ** 0.5)
    w1 = jax.random.uniform(k1, (n_units, hidden), dtype, -bound1, bound1)
    b1 = jax.random.uniform(k2, (1, hidden), dtype, -bound1, bound1)
    w2 = jax.random.uniform(k3, (hidden, n_units), dtype, -bound2, bound2)
    b2 = jax.random.uniform(k4, (1, n_units), dtype, -bound2, bound2)
    return w1, b1, w2, b2


if __name__ == "__main__":
    key = jax.random.PRNGKey(0)
    kx, kp = jax.random.split(key)

    batch, seq, n_units = 2, 8, 32
    x = jax.random.normal(kx, (batch, seq, n_units), jnp.float32)
    w1, b1, w2, b2 = init_mlp_params(kp, n_units)

    # Pure-JAX f32 reference (eval mode; dropout is identity).
    ref = jnp.maximum(x.reshape(-1, n_units) @ w1 + b1, 0.0) @ w2 + b2
    ref = ref.reshape(batch, seq, n_units)

    # 1) Default path: weights fully resident (single hidden chunk), bf16 MXU.
    out = mlp_forward(x, w1, b1, w2, b2, dropout_p=0.1, train=False, seed=0)
    out = jax.block_until_ready(out)
    assert out.shape == ref.shape
    assert jnp.allclose(out, ref, atol=2e-2, rtol=2e-2), "mismatch vs reference (resident)"

    # 2) Hidden-chunked reduction path (large-weight / small-VMEM variant).
    out_c = mlp_forward(x, w1, b1, w2, b2, dropout_p=0.1, train=False, seed=0,
                        hidden_chunk=512)
    out_c = jax.block_until_ready(out_c)
    assert jnp.allclose(out_c, ref, atol=2e-2, rtol=2e-2), "mismatch vs reference (chunked)"

    # 3) Train-mode dropout path (stochastic: sanity-check shape/finiteness only).
    out_t = mlp_forward(x, w1, b1, w2, b2, dropout_p=0.1, train=True, seed=0)
    out_t = jax.block_until_ready(out_t)
    assert out_t.shape == ref.shape
    assert bool(jnp.isfinite(out_t).all()), "non-finite values in dropout path"

    print("KERNEL_OK")
</pallas_src>

<mosaic_0001>
module attributes {stable_mosaic.version = 11 : i64} {
  func.func @mlp_kernel(%arg0: i32, %arg1: i32, %arg2: memref<1xi32, #tpu.memory_space<smem>>, %arg3: memref<8x128xbf16, #tpu.memory_space<vmem>>, %arg4: memref<128x2048xbf16, #tpu.memory_space<vmem>>, %arg5: memref<1x2048xf32, #tpu.memory_space<vmem>>, %arg6: memref<2048x128xbf16, #tpu.memory_space<vmem>>, %arg7: memref<1x128xf32, #tpu.memory_space<vmem>>, %arg8: memref<8x128xf32, #tpu.memory_space<vmem>>) attributes {dimension_semantics = [#tpu.dimension_semantics<parallel>, #tpu.dimension_semantics<arbitrary>], iteration_bounds = array<i64: 2, 1>, scalar_prefetch = 1 : i64, scratch_operands = 0 : i64, tpu.core_type = #tpu.core_type<tc>, window_params = [{transform_indices = @transform_0, window_bounds = array<i64: 8, 128>}, {pipeline_mode = #tpu.pipeline_mode<synchronous>, transform_indices = @transform_1, window_bounds = array<i64: 128, 2048>}, {pipeline_mode = #tpu.pipeline_mode<synchronous>, transform_indices = @transform_2, window_bounds = array<i64: 1, 2048>}, {pipeline_mode = #tpu.pipeline_mode<synchronous>, transform_indices = @transform_3, window_bounds = array<i64: 2048, 128>}, {pipeline_mode = #tpu.pipeline_mode<synchronous>, transform_indices = @transform_4, window_bounds = array<i64: 1, 128>}, {transform_indices = @transform_5, window_bounds = array<i64: 8, 128>}]} {
    %c0 = arith.constant 0 : index
    %c0_0 = arith.constant 0 : index
    %0 = vector.load %arg3[%c0, %c0_0] : memref<8x128xbf16, #tpu.memory_space<vmem>>, vector<8x128xbf16>
    %c0_1 = arith.constant 0 : index
    %c0_2 = arith.constant 0 : index
    %1 = vector.load %arg4[%c0_1, %c0_2] : memref<128x2048xbf16, #tpu.memory_space<vmem>>, vector<128x2048xbf16>
    %cst = arith.constant dense<0.000000e+00> : vector<8x2048xf32>
    %2 = tpu.matmul %0, %1, %cst {dimension_numbers = #tpu.dot_dimension_numbers<[1], [0], [0], [1], [0, 0, 1, 1], [], []>} : vector<8x128xbf16>, vector<128x2048xbf16>, vector<8x2048xf32> -> vector<8x2048xf32>
    %c0_3 = arith.constant 0 : index
    %c0_4 = arith.constant 0 : index
    %3 = vector.load %arg5[%c0_3, %c0_4] : memref<1x2048xf32, #tpu.memory_space<vmem>>, vector<1x2048xf32>
    %4 = vector.broadcast %3 : vector<1x2048xf32> to vector<8x2048xf32>
    %5 = arith.addf %2, %4 : vector<8x2048xf32>
    %cst_5 = arith.constant 0.000000e+00 : f32
    %6 = vector.broadcast %cst_5 : f32 to vector<8x2048xf32>
    %7 = arith.maximumf %5, %6 : vector<8x2048xf32>
    %8 = arith.truncf %7 : vector<8x2048xf32> to vector<8x2048xbf16>
    %c0_6 = arith.constant 0 : index
    %c0_7 = arith.constant 0 : index
    %9 = vector.load %arg6[%c0_6, %c0_7] : memref<2048x128xbf16, #tpu.memory_space<vmem>>, vector<2048x128xbf16>
    %cst_8 = arith.constant dense<0.000000e+00> : vector<8x128xf32>
    %10 = tpu.matmul %8, %9, %cst_8 {dimension_numbers = #tpu.dot_dimension_numbers<[1], [0], [0], [1], [0, 0, 1, 1], [], []>} : vector<8x2048xbf16>, vector<2048x128xbf16>, vector<8x128xf32> -> vector<8x128xf32>
    %c0_9 = arith.constant 0 : index
    %c0_10 = arith.constant 0 : index
    %11 = vector.load %arg7[%c0_9, %c0_10] : memref<1x128xf32, #tpu.memory_space<vmem>>, vector<1x128xf32>
    %12 = vector.broadcast %11 : vector<1x128xf32> to vector<8x128xf32>
    %13 = arith.addf %10, %12 : vector<8x128xf32>
    %c0_11 = arith.constant 0 : index
    %c0_12 = arith.constant 0 : index
    %14 = vector.load %arg8[%c0_11, %c0_12] : memref<8x128xf32, #tpu.memory_space<vmem>>, vector<8x128xf32>
    tpu.vector_store %arg8[%c0_11, %c0_12], %13 {strides = array<i32>} : memref<8x128xf32, #tpu.memory_space<vmem>>, vector<8x128xf32>,
    return
  }
  func.func @transform_0(%arg0: i32, %arg1: i32, %arg2: memref<1xi32, #tpu.memory_space<smem>>) -> (i32, i32) {
    %c0_i32 = arith.constant 0 : i32
    %c0_i32_0 = arith.constant 0 : i32
    return %arg0, %c0_i32 : i32, i32
  }
  func.func @transform_1(%arg0: i32, %arg1: i32, %arg2: memref<1xi32, #tpu.memory_space<smem>>) -> (i32, i32) {
    %c0_i32 = arith.constant 0 : i32
    %c0_i32_0 = arith.constant 0 : i32
    return %c0_i32, %arg1 : i32, i32
  }
  func.func @transform_2(%arg0: i32, %arg1: i32, %arg2: memref<1xi32, #tpu.memory_space<smem>>) -> (i32, i32) {
    %c0_i32 = arith.constant 0 : i32
    %c0_i32_0 = arith.constant 0 : i32
    return %c0_i32, %arg1 : i32, i32
  }
  func.func @transform_3(%arg0: i32, %arg1: i32, %arg2: memref<1xi32, #tpu.memory_space<smem>>) -> (i32, i32) {
    %c0_i32 = arith.constant 0 : i32
    %c0_i32_0 = arith.constant 0 : i32
    return %arg1, %c0_i32 : i32, i32
  }
  func.func @transform_4(%arg0: i32, %arg1: i32, %arg2: memref<1xi32, #tpu.memory_space<smem>>) -> (i32, i32) {
    %c0_i32 = arith.constant 0 : i32
    %c0_i32_0 = arith.constant 0 : i32
    %c0_i32_1 = arith.constant 0 : i32
    return %c0_i32, %c0_i32_0 : i32, i32
  }
  func.func @transform_5(%arg0: i32, %arg1: i32, %arg2: memref<1xi32, #tpu.memory_space<smem>>) -> (i32, i32) {
    %c0_i32 = arith.constant 0 : i32
    %c0_i32_0 = arith.constant 0 : i32
    return %arg0, %c0_i32 : i32, i32
  }
}

</mosaic_0001>

<llo_original>
// kernel: tpu_custom_call.1
$region0: #{tpu_custom_call.1}
  #allocation0 [shape = 'u32[]', space=smem, size = 0x4, offset = 0x4, fixed_abs, tag = 'smem constant byte address 0x4 - core index']
  #allocation1 [shape = 'u32[144,128]{1,0:T(1,128)}', space=vmem, size = 0x12000, scoped, tag = 'internal scratch']
  #allocation2 [shape = 's32[1]{0}', space=sflag, size = 0x4, scoped, tag = 'scoped memory for tpu_custom_call.1']
  #allocation3 [shape = 's32[1]{0:T(128)S(6)}', space=smem, size = 0x200, scoped, tag = 'prefetched SMEM operand 0']
  %s0 = inlined_call_operand.<no memory space> [shape: s32[1], index: 0, kind: input, shape index: {}]
  %s1 = inlined_call_operand.hbm [shape: bf16[16,128], index: 1, kind: input, shape index: {}]
  %s2 = inlined_call_operand.hbm [shape: bf16[128,2048], index: 2, kind: input, shape index: {}]
  %s3 = inlined_call_operand.hbm [shape: f32[1,2048], index: 3, kind: input, shape index: {}]
  %s4 = inlined_call_operand.hbm [shape: bf16[2048,128], index: 4, kind: input, shape index: {}]
  %s5 = inlined_call_operand.vmem [shape: f32[1,128], index: 5, kind: input, shape index: {}]
  %s6 = inlined_call_operand.hbm [shape: f32[16,128], index: 6, kind: output, shape index: {}]
  %s7 = sld [smem:[#allocation0]]
  $region69: #{tpu_custom_call.1} parent=0
    _
  %s9 = ssub.s32 1, %s7
  %s10 = scalar_select 0, %s9, %s7
  %11 = sst [smem:[#allocation3]] %s0
  $region1: #{tpu_custom_call.1} parent=0
    #allocation4 [shape = 'u8[4096]{0}', space=vmem, size = 0x1000, scoped, tag = 'input window, operand 1']
    #allocation5 [shape = 's32[2]{0}', space=sflag, size = 0x8, scoped, tag = 'scoped memory for tpu_custom_call.1']
    #allocation6 [shape = 's32[2]{0}', space=sflag, size = 0x8, scoped, tag = 'scoped memory for tpu_custom_call.1']
    #allocation7 [shape = 'u8[524288]{0}', space=vmem, size = 0x80000, scoped, tag = 'input window, operand 2, single buffered']
    #allocation8 [shape = 's32[1]{0}', space=sflag, size = 0x4, scoped, tag = 'scoped memory for tpu_custom_call.1']
    #allocation9 [shape = 'u8[8192]{0}', space=vmem, size = 0x2000, scoped, tag = 'input window, operand 3, single buffered']
    #allocation10 [shape = 'u8[524288]{0}', space=vmem, size = 0x80000, scoped, tag = 'input window, operand 4, single buffered']
    #allocation11 [shape = 's32[1]{0}', space=sflag, size = 0x4, scoped, tag = 'scoped memory for tpu_custom_call.1']
    #allocation12 [shape = 'u8[8192]{0}', space=vmem, size = 0x2000, scoped, tag = 'output window, operand 0']
    %12 = vsyncpa [#allocation5], 0
    %s13 = scalar_lea.sflag [#allocation5], 1
    %14 = vsyncpa %s13, 0
    %15 = vsyncpa [#allocation8], 0
    %16 = vsyncpa [#allocation11], 0
    %17 = vsyncpa [#allocation6], 0
    %s18 = scalar_lea.sflag [#allocation6], 1
    %19 = vsyncpa %s18, 0
    loop: start=0, step=1, limit=4
    $region2: #{tpu_custom_call.1} parent=1 // loop_pre_header
      _
    $region3: #{tpu_custom_call.1} parent=1 // loop_header
      %s21 = sphi 0, %s25
      %p22 = scmp.ge.s32.totalorder %s21, 4
      %s28 = sphi 0, %s40
      %s29 = sphi 0, %s36
      %s30 = sphi 0, %s28
      %s31 = sphi 0, %s29
      %s32 = sphi 0, %s30
      %s33 = sphi 0, %s31
      %s43 = sphi 0, %s45
      %s46 = sphi 0, %s43
      %s47 = sphi 0, %s46
      %s63 = sphi 0, %s47
      %s69 = sphi 0, %s71
      %s72 = sphi 0, %s69
      %s73 = sphi 0, %s72
      %s89 = sphi 0, %s73
      %s95 = sphi 0, %s97
      %s98 = sphi 0, %s95
      %s99 = sphi 0, %s98
      %s115 = sphi 0, %s99
      %s121 = sphi 0, %s123
      %s124 = sphi 0, %s121
      %s125 = sphi 0, %s124
      %s141 = sphi 0, %s125
      %s145 = sphi 0, %s145
      %s147 = sphi 0, %s145
      %s148 = sphi 0, %s147
      %s162 = sphi 0, %s148
      %s168 = sphi 0, %s170
      %s171 = sphi 0, %s168
      %s172 = sphi 0, %s171
      %s188 = sphi 0, %s172
    $region4: #{tpu_custom_call.1} parent=1 // loop_header_branch
      %24 = sbr.rel (%p22) target = $region8
    $region5: #{tpu_custom_call.1} parent=1 // loop_body
      %s26 = ssub.s32 %s21, 1
      %s27 = ssub.s32 %s21, 2
      %s34 = sadd.s32 1, %s29
      %p35 = scmp.ge.s32.totalorder %s34, 1
      %s36 = scalar_select %p35, 0, %s34
      %s37 = sadd.s32 1, %s28
      %s38 = scalar_select %p35, %s37, %s28
      %p39 = scmp.ge.s32.totalorder %s38, 2
      %s40 = scalar_select %p39, 0, %s38
      %s41 = ssub.s32 %s28, %s40
      %p42 = scmp.eq.s32.totalorder %s41, 0
      %s44 = sadd.s32 %s43, 1
      %s45 = scalar_select %p42, %s43, %s44
      %p48 = pneg %p42
      %p49 = scmp.eq.s32.totalorder %s21, 1
      %p50 = por %p48, %p49
      %p51 = scmp.ne.s32.totalorder %s43, %s46
      %p52 = scmp.eq.s32.totalorder %s21, 0
      %p53 = por %p51, %p52
      %p54 = scmp.ne.s32.totalorder %s43, %s46
      %p55 = scmp.eq.s32.totalorder %s26, 1
      %p56 = por %p54, %p55
      %p57 = scmp.ne.s32.totalorder %s46, %s47
      %p58 = scmp.eq.s32.totalorder %s26, 0
      %p59 = por %p57, %p58
      %p60 = scmp.ne.s32.totalorder %s46, %s47
      %p61 = scmp.eq.s32.totalorder %s27, 1
      %p62 = por %p60, %p61
      %p64 = scmp.ne.s32.totalorder %s47, %s63
      %p65 = scmp.eq.s32.totalorder %s27, 0
      %p66 = por %p64, %p65
      %s67 = ssub.s32 %s29, %s36
      %p68 = scmp.eq.s32.totalorder %s67, 0
      %s70 = sadd.s32 %s69, 1
      %s71 = scalar_select %p68, %s69, %s70
      %p74 = pneg %p68
      %p75 = scmp.eq.s32.totalorder %s21, 1
      %p76 = por %p74, %p75
      %p77 = scmp.ne.s32.totalorder %s69, %s72
      %p78 = scmp.eq.s32.totalorder %s21, 0
      %p79 = por %p77, %p78
      %p80 = scmp.ne.s32.totalorder %s69, %s72
      %p81 = scmp.eq.s32.totalorder %s26, 1
      %p82 = por %p80, %p81
      %p83 = scmp.ne.s32.totalorder %s72, %s73
      %p84 = scmp.eq.s32.totalorder %s26, 0
      %p85 = por %p83, %p84
      %p86 = scmp.ne.s32.totalorder %s72, %s73
      %p87 = scmp.eq.s32.totalorder %s27, 1
      %p88 = por %p86, %p87
      %p90 = scmp.ne.s32.totalorder %s73, %s89
      %p91 = scmp.eq.s32.totalorder %s27, 0
      %p92 = por %p90, %p91
      %s93 = ssub.s32 %s29, %s36
      %p94 = scmp.eq.s32.totalorder %s93, 0
      %s96 = sadd.s32 %s95, 1
      %s97 = scalar_select %p94, %s95, %s96
      %p100 = pneg %p94
      %p101 = scmp.eq.s32.totalorder %s21, 1
      %p102 = por %p100, %p101
      %p103 = scmp.ne.s32.totalorder %s95, %s98
      %p104 = scmp.eq.s32.totalorder %s21, 0
      %p105 = por %p103, %p104
      %p106 = scmp.ne.s32.totalorder %s95, %s98
      %p107 = scmp.eq.s32.totalorder %s26, 1
      %p108 = por %p106, %p107
      %p109 = scmp.ne.s32.totalorder %s98, %s99
      %p110 = scmp.eq.s32.totalorder %s26, 0
      %p111 = por %p109, %p110
      %p112 = scmp.ne.s32.totalorder %s98, %s99
      %p113 = scmp.eq.s32.totalorder %s27, 1
      %p114 = por %p112, %p113
      %p116 = scmp.ne.s32.totalorder %s99, %s115
      %p117 = scmp.eq.s32.totalorder %s27, 0
      %p118 = por %p116, %p117
      %s119 = ssub.s32 %s29, %s36
      %p120 = scmp.eq.s32.totalorder %s119, 0
      %s122 = sadd.s32 %s121, 1
      %s123 = scalar_select %p120, %s121, %s122
      %p126 = pneg %p120
      %p127 = scmp.eq.s32.totalorder %s21, 1
      %p128 = por %p126, %p127
      %p129 = scmp.ne.s32.totalorder %s121, %s124
      %p130 = scmp.eq.s32.totalorder %s21, 0
      %p131 = por %p129, %p130
      %p132 = scmp.ne.s32.totalorder %s121, %s124
      %p133 = scmp.eq.s32.totalorder %s26, 1
      %p134 = por %p132, %p133
      %p135 = scmp.ne.s32.totalorder %s124, %s125
      %p136 = scmp.eq.s32.totalorder %s26, 0
      %p137 = por %p135, %p136
      %p138 = scmp.ne.s32.totalorder %s124, %s125
      %p139 = scmp.eq.s32.totalorder %s27, 1
      %p140 = por %p138, %p139
      %p142 = scmp.ne.s32.totalorder %s125, %s141
      %p143 = scmp.eq.s32.totalorder %s27, 0
      %p144 = por %p142, %p143
      %s146 = sadd.s32 %s145, 1
      %p149 = scmp.eq.s32.totalorder %s21, 1
      %p150 = scmp.ne.s32.totalorder %s145, %s147
      %p151 = scmp.eq.s32.totalorder %s21, 0
      %p152 = por %p150, %p151
      %p153 = scmp.ne.s32.totalorder %s145, %s147
      %p154 = scmp.eq.s32.totalorder %s26, 1
      %p155 = por %p153, %p154
      %p156 = scmp.ne.s32.totalorder %s147, %s148
      %p157 = scmp.eq.s32.totalorder %s26, 0
      %p158 = por %p156, %p157
      %p159 = scmp.ne.s32.totalorder %s147, %s148
      %p160 = scmp.eq.s32.totalorder %s27, 1
      %p161 = por %p159, %p160
      %p163 = scmp.ne.s32.totalorder %s148, %s162
      %p164 = scmp.eq.s32.totalorder %s27, 0
      %p165 = por %p163, %p164
      %s166 = ssub.s32 %s28, %s40
      %p167 = scmp.eq.s32.totalorder %s166, 0
      %s169 = sadd.s32 %s168, 1
      %s170 = scalar_select %p167, %s168, %s169
      %p173 = pneg %p167
      %p174 = scmp.eq.s32.totalorder %s21, 1
      %p175 = por %p173, %p174
      %p176 = scmp.ne.s32.totalorder %s168, %s171
      %p177 = scmp.eq.s32.totalorder %s21, 0
      %p178 = por %p176, %p177
      %p179 = scmp.ne.s32.totalorder %s168, %s171
      %p180 = scmp.eq.s32.totalorder %s26, 1
      %p181 = por %p179, %p180
      %p182 = scmp.ne.s32.totalorder %s171, %s172
      %p183 = scmp.eq.s32.totalorder %s26, 0
      %p184 = por %p182, %p183
      %p185 = scmp.ne.s32.totalorder %s171, %s172
      %p186 = scmp.eq.s32.totalorder %s27, 1
      %p187 = por %p185, %p186
      %p189 = scmp.ne.s32.totalorder %s172, %s188
      %p190 = scmp.eq.s32.totalorder %s27, 0
      %p191 = por %p189, %p190
      %p192 = scmp.le.s32.totalorder 1, %s21
      %p193 = scmp.lt.s32.totalorder %s21, 3
      %p194 = pnand %p192, %p193
      %p195 = pneg %p194
      // Predicated region
      $region9: #{tpu_custom_call.1} parent=5 // pred_check
        _
      $region10: #{tpu_custom_call.1} parent=5 // pred_check_branch
        %197 = sbr.rel (%p194) target = $region12
      $region11: #{tpu_custom_call.1} parent=5 // pred_region
        %s198 = ssub.s32 %s21, 1
        // Predicated region
        $region13: #{tpu_custom_call.1} parent=11 // pred_check
          %p199 = pneg %p85
        $region14: #{tpu_custom_call.1} parent=11 // pred_check_branch
          %201 = sbr.rel (%p199) target = $region16
        $region15: #{tpu_custom_call.1} parent=11 // pred_region
          %s202 = smul.u32 16, %s31
          %s204 = ssub.s32 16384, 16384
          %205 = vsyncadd [#allocation8], %s204
          %s206 = smul.addr %s202, 64
          %s207 = scalar_lea.hbm %s2, %s206
          %s208 = sshll.u32 [#allocation7], 4
          %s209 = int_to_ptr.vmem [resolvable:$true] %s208
          %214 = dma.hbm_to_vmem [thread:$0]  %s207, 16384, %s209, [#allocation8], 1024, 1024, 64
        $region16: #{tpu_custom_call.1} parent=11 // pred_fallthru
          _
        // Predicated region
        $region17: #{tpu_custom_call.1} parent=11 // pred_check
          %p215 = pneg %p111
        $region18: #{tpu_custom_call.1} parent=11 // pred_check_branch
          %217 = sbr.rel (%p215) target = $region20
        $region19: #{tpu_custom_call.1} parent=11 // pred_region
          %s218 = smul.u32 16, %s31
          %s220 = ssub.s32 256, 256
          %221 = vsyncadd [#allocation8], %s220
          %s222 = smul.addr %s218, 16
          %s223 = scalar_lea.hbm %s3, %s222
          %s225 = sshll.u32 [#allocation9], 4
          %s226 = int_to_ptr.vmem [resolvable:$true] %s225
          %228 = dma.hbm_to_vmem [thread:$0]  %s223, 256, %s226, [#allocation8]
        $region20: #{tpu_custom_call.1} parent=11 // pred_fallthru
          _
        // Predicated region
        $region21: #{tpu_custom_call.1} parent=11 // pred_check
          %p229 = pneg %p137
        $region22: #{tpu_custom_call.1} parent=11 // pred_check_branch
          %231 = sbr.rel (%p229) target = $region24
        $region23: #{tpu_custom_call.1} parent=11 // pred_region
          %s232 = smul.u32 256, %s31
          %s234 = ssub.s32 16384, 16384
          %235 = vsyncadd [#allocation11], %s234
          %s236 = smul.addr %s232, 64
          %s237 = scalar_lea.hbm %s4, %s236
          %s238 = sshll.u32 [#allocation10], 4
          %s239 = int_to_ptr.vmem [resolvable:$true] %s238
          %244 = dma.hbm_to_vmem [thread:$0]  %s237, 16384, %s239, [#allocation11], 64, 64, 4
        $region24: #{tpu_custom_call.1} parent=11 // pred_fallthru
          _
        // Predicated region
        $region25: #{tpu_custom_call.1} parent=11 // pred_check
          %p245 = pneg %p158
        $region26: #{tpu_custom_call.1} parent=11 // pred_check_branch
          %247 = sbr.rel (%p245) target = $region28
        $region27: #{tpu_custom_call.1} parent=11 // pred_region
          _
        $region28: #{tpu_custom_call.1} parent=11 // pred_fallthru
          _
      $region12: #{tpu_custom_call.1} parent=5 // pred_fallthru
        _
      %p248 = scmp.lt.s32.totalorder %s21, 2
      // Predicated region
      $region29: #{tpu_custom_call.1} parent=5 // pred_check
        %p249 = pneg %p248
      $region30: #{tpu_custom_call.1} parent=5 // pred_check_branch
        %251 = sbr.rel (%p249) target = $region32
      $region31: #{tpu_custom_call.1} parent=5 // pred_region
        // Predicated region
        $region33: #{tpu_custom_call.1} parent=31 // pred_check
          %p252 = pneg %p53
        $region34: #{tpu_custom_call.1} parent=31 // pred_check_branch
          %254 = sbr.rel (%p252) target = $region36
        $region35: #{tpu_custom_call.1} parent=31 // pred_region
          %s255 = sand.u32 %s43, 1
          %s256 = scalar_lea.sflag [#allocation5], %s255
          %s257 = sand.u32 %s43, 1
          %s258 = smul.addr %s257, 4
          %s259 = scalar_lea.vmem [#allocation4], %s258
          %s261 = ssub.s32 64, 64
          %262 = vsyncadd %s256, %s261
          %s263 = smul.addr %s28, 64
          %s264 = scalar_lea.hbm %s1, %s263
          %s266 = sshll.u32 %s259, 4
          %s267 = int_to_ptr.vmem [resolvable:$true] %s266
          %269 = dma.hbm_to_vmem [thread:$0]  %s264, 64, %s267, %s256
        $region36: #{tpu_custom_call.1} parent=31 // pred_fallthru
          _
      $region32: #{tpu_custom_call.1} parent=5 // pred_fallthru
        _
      %p270 = scmp.le.s32.totalorder 1, %s21
      %p271 = scmp.lt.s32.totalorder %s21, 3
      %p272 = pnand %p270, %p271
      %p273 = pneg %p272
      // Predicated region
      $region37: #{tpu_custom_call.1} parent=5 // pred_check
        _
      $region38: #{tpu_custom_call.1} parent=5 // pred_check_branch
        %275 = sbr.rel (%p272) target = $region40
      $region39: #{tpu_custom_call.1} parent=5 // pred_region
        %s276 = ssub.s32 %s21, 1
        %s277 = sand.u32 %s46, 1
        %s278 = scalar_lea.sflag [#allocation5], %s277
        %s279 = sand.u32 %s46, 1
        %s280 = smul.addr %s279, 4
        %s281 = scalar_lea.vmem [#allocation4], %s280
        // Predicated region
        $region41: #{tpu_custom_call.1} parent=39 // pred_check
          %p282 = pneg %p59
        $region42: #{tpu_custom_call.1} parent=39 // pred_check_branch
          %284 = sbr.rel (%p282) target = $region44
        $region43: #{tpu_custom_call.1} parent=39 // pred_region
          %285 = dma.done %s278, 64
        $region44: #{tpu_custom_call.1} parent=39 // pred_fallthru
          _
        // Predicated region
        $region45: #{tpu_custom_call.1} parent=39 // pred_check
          %p286 = pneg %p85
        $region46: #{tpu_custom_call.1} parent=39 // pred_check_branch
          %288 = sbr.rel (%p286) target = $region48
        $region47: #{tpu_custom_call.1} parent=39 // pred_region
          %289 = dma.done [#allocation8], 16384
        $region48: #{tpu_custom_call.1} parent=39 // pred_fallthru
          _
        // Predicated region
        $region49: #{tpu_custom_call.1} parent=39 // pred_check
          %p290 = pneg %p111
        $region50: #{tpu_custom_call.1} parent=39 // pred_check_branch
          %292 = sbr.rel (%p290) target = $region52
        $region51: #{tpu_custom_call.1} parent=39 // pred_region
          %293 = dma.done [#allocation8], 256
        $region52: #{tpu_custom_call.1} parent=39 // pred_fallthru
          _
        // Predicated region
        $region53: #{tpu_custom_call.1} parent=39 // pred_check
          %p294 = pneg %p137
        $region54: #{tpu_custom_call.1} parent=39 // pred_check_branch
          %296 = sbr.rel (%p294) target = $region56
        $region55: #{tpu_custom_call.1} parent=39 // pred_region
          %297 = dma.done [#allocation11], 16384
        $region56: #{tpu_custom_call.1} parent=39 // pred_fallthru
          _
        %s298 = sand.u32 %s46, 1
        %s299 = scalar_lea.sflag [#allocation5], %s298
        %s300 = sand.u32 %s46, 1
        %s301 = smul.addr %s300, 4
        %s302 = scalar_lea.vmem [#allocation4], %s301
        %p303 = pneg %p59
        %p304 = pneg %p56
        %p305 = pneg %p85
        %p306 = pneg %p82
        %p307 = pneg %p111
        %p308 = pneg %p108
        %p309 = pneg %p137
        %p310 = pneg %p134
        %p311 = pneg %p158
        %p312 = pneg %p155
        %p313 = pneg %p184
        %p314 = pneg %p181
        %s315 = sand.u32 %s171, 1
        %s316 = scalar_lea.sflag [#allocation6], %s315
        %s317 = sand.u32 %s171, 1
        %s318 = smul.addr %s317, 8
        %s319 = scalar_lea.vmem [#allocation12], %s318
        %s320 = smul.u32 16, %s31
        %s321 = smul.u32 16, %s31
        %s322 = smul.u32 256, %s31
        %v324 = vld [vmem:[%s281] sm:$0xf]
        %v325 = vld [vmem:[#allocation7] sm:$0xff]
        %v326 = vld [vmem:[#allocation7 + $0x8] sm:$0xff]
        %v327 = vld [vmem:[#allocation7 + $0x10] sm:$0xff]
        %v328 = vld [vmem:[#allocation7 + $0x18] sm:$0xff]
        %v329 = vld [vmem:[#allocation7 + $0x20] sm:$0xff]
        %v330 = vld [vmem:[#allocation7 + $0x28] sm:$0xff]
        %v331 = vld [vmem:[#allocation7 + $0x30] sm:$0xff]
        %v332 = vld [vmem:[#allocation7 + $0x38] sm:$0xff]
        %v333 = vld [vmem:[#allocation7 + $0x40] sm:$0xff]
        %v334 = vld [vmem:[#allocation7 + $0x48] sm:$0xff]
        %v335 = vld [vmem:[#allocation7 + $0x50] sm:$0xff]
        %v336 = vld [vmem:[#allocation7 + $0x58] sm:$0xff]
        %v337 = vld [vmem:[#allocation7 + $0x60] sm:$0xff]
        %v338 = vld [vmem:[#allocation7 + $0x68] sm:$0xff]
        %v339 = vld [vmem:[#allocation7 + $0x70] sm:$0xff]
        %v340 = vld [vmem:[#allocation7 + $0x78] sm:$0xff]
        %v341 = vld [vmem:[#allocation7 + $0x80] sm:$0xff]
        %v342 = vld [vmem:[#allocation7 + $0x88] sm:$0xff]
        %v343 = vld [vmem:[#allocation7 + $0x90] sm:$0xff]
        %v344 = vld [vmem:[#allocation7 + $0x98] sm:$0xff]
        %v345 = vld [vmem:[#allocation7 + $0xa0] sm:$0xff]
        %v346 = vld [vmem:[#allocation7 + $0xa8] sm:$0xff]
        %v347 = vld [vmem:[#allocation7 + $0xb0] sm:$0xff]
        %v348 = vld [vmem:[#allocation7 + $0xb8] sm:$0xff]
        %v349 = vld [vmem:[#allocation7 + $0xc0] sm:$0xff]
        %v350 = vld [vmem:[#allocation7 + $0xc8] sm:$0xff]
        %v351 = vld [vmem:[#allocation7 + $0xd0] sm:$0xff]
        %v352 = vld [vmem:[#allocation7 + $0xd8] sm:$0xff]
        %v353 = vld [vmem:[#allocation7 + $0xe0] sm:$0xff]
        %v354 = vld [vmem:[#allocation7 + $0xe8] sm:$0xff]
        %v355 = vld [vmem:[#allocation7 + $0xf0] sm:$0xff]
        %v356 = vld [vmem:[#allocation7 + $0xf8] sm:$0xff]
        %v357 = vld [vmem:[#allocation7 + $0x100] sm:$0xff]
        %v358 = vld [vmem:[#allocation7 + $0x108] sm:$0xff]
        %v359 = vld [vmem:[#allocation7 + $0x110] sm:$0xff]
        %v360 = vld [vmem:[#allocation7 + $0x118] sm:$0xff]
        %v361 = vld [vmem:[#allocation7 + $0x120] sm:$0xff]
        %v362 = vld [vmem:[#allocation7 + $0x128] sm:$0xff]
        %v363 = vld [vmem:[#allocation7 + $0x130] sm:$0xff]
        %v364 = vld [vmem:[#allocation7 + $0x138] sm:$0xff]
        %v365 = vld [vmem:[#allocation7 + $0x140] sm:$0xff]
        %v366 = vld [vmem:[#allocation7 + $0x148] sm:$0xff]
        %v367 = vld [vmem:[#allocation7 + $0x150] sm:$0xff]
        %v368 = vld [vmem:[#allocation7 + $0x158] sm:$0xff]
        %v369 = vld [vmem:[#allocation7 + $0x160] sm:$0xff]
        %v370 = vld [vmem:[#allocation7 + $0x168] sm:$0xff]
        %v371 = vld [vmem:[#allocation7 + $0x170] sm:$0xff]
        %v372 = vld [vmem:[#allocation7 + $0x178] sm:$0xff]
        %v373 = vld [vmem:[#allocation7 + $0x180] sm:$0xff]
        %v374 = vld [vmem:[#allocation7 + $0x188] sm:$0xff]
        %v375 = vld [vmem:[#allocation7 + $0x190] sm:$0xff]
        %v376 = vld [vmem:[#allocation7 + $0x198] sm:$0xff]
        %v377 = vld [vmem:[#allocation7 + $0x1a0] sm:$0xff]
        %v378 = vld [vmem:[#allocation7 + $0x1a8] sm:$0xff]
        %v379 = vld [vmem:[#allocation7 + $0x1b0] sm:$0xff]
        %v380 = vld [vmem:[#allocation7 + $0x1b8] sm:$0xff]
        %v381 = vld [vmem:[#allocation7 + $0x1c0] sm:$0xff]
        %v382 = vld [vmem:[#allocation7 + $0x1c8] sm:$0xff]
        %v383 = vld [vmem:[#allocation7 + $0x1d0] sm:$0xff]
        %v384 = vld [vmem:[#allocation7 + $0x1d8] sm:$0xff]
        %v385 = vld [vmem:[#allocation7 + $0x1e0] sm:$0xff]
        %v386 = vld [vmem:[#allocation7 + $0x1e8] sm:$0xff]
        %v387 = vld [vmem:[#allocation7 + $0x1f0] sm:$0xff]
        %v388 = vld [vmem:[#allocation7 + $0x1f8] sm:$0xff]
        %v389 = vld [vmem:[#allocation7 + $0x200] sm:$0xff]
        %v390 = vld [vmem:[#allocation7 + $0x208] sm:$0xff]
        %v391 = vld [vmem:[#allocation7 + $0x210] sm:$0xff]
        %v392 = vld [vmem:[#allocation7 + $0x218] sm:$0xff]
        %v393 = vld [vmem:[#allocation7 + $0x220] sm:$0xff]
        %v394 = vld [vmem:[#allocation7 + $0x228] sm:$0xff]
        %v395 = vld [vmem:[#allocation7 + $0x230] sm:$0xff]
        %v396 = vld [vmem:[#allocation7 + $0x238] sm:$0xff]
        %v397 = vld [vmem:[#allocation7 + $0x240] sm:$0xff]
        %v398 = vld [vmem:[#allocation7 + $0x248] sm:$0xff]
        %v399 = vld [vmem:[#allocation7 + $0x250] sm:$0xff]
        %v400 = vld [vmem:[#allocation7 + $0x258] sm:$0xff]
        %v401 = vld [vmem:[#allocation7 + $0x260] sm:$0xff]
        %v402 = vld [vmem:[#allocation7 + $0x268] sm:$0xff]
        %v403 = vld [vmem:[#allocation7 + $0x270] sm:$0xff]
        %v404 = vld [vmem:[#allocation7 + $0x278] sm:$0xff]
        %v405 = vld [vmem:[#allocation7 + $0x280] sm:$0xff]
        %v406 = vld [vmem:[#allocation7 + $0x288] sm:$0xff]
        %v407 = vld [vmem:[#allocation7 + $0x290] sm:$0xff]
        %v408 = vld [vmem:[#allocation7 + $0x298] sm:$0xff]
        %v409 = vld [vmem:[#allocation7 + $0x2a0] sm:$0xff]
        %v410 = vld [vmem:[#allocation7 + $0x2a8] sm:$0xff]
        %v411 = vld [vmem:[#allocation7 + $0x2b0] sm:$0xff]
        %v412 = vld [vmem:[#allocation7 + $0x2b8] sm:$0xff]
        %v413 = vld [vmem:[#allocation7 + $0x2c0] sm:$0xff]
        %v414 = vld [vmem:[#allocation7 + $0x2c8] sm:$0xff]
        %v415 = vld [vmem:[#allocation7 + $0x2d0] sm:$0xff]
        %v416 = vld [vmem:[#allocation7 + $0x2d8] sm:$0xff]
        %v417 = vld [vmem:[#allocation7 + $0x2e0] sm:$0xff]
        %v418 = vld [vmem:[#allocation7 + $0x2e8] sm:$0xff]
        %v419 = vld [vmem:[#allocation7 + $0x2f0] sm:$0xff]
        %v420 = vld [vmem:[#allocation7 + $0x2f8] sm:$0xff]
        %v421 = vld [vmem:[#allocation7 + $0x300] sm:$0xff]
        %v422 = vld [vmem:[#allocation7 + $0x308] sm:$0xff]
        %v423 = vld [vmem:[#allocation7 + $0x310] sm:$0xff]
        %v424 = vld [vmem:[#allocation7 + $0x318] sm:$0xff]
        %v425 = vld [vmem:[#allocation7 + $0x320] sm:$0xff]
        %v426 = vld [vmem:[#allocation7 + $0x328] sm:$0xff]
        %v427 = vld [vmem:[#allocation7 + $0x330] sm:$0xff]
        %v428 = vld [vmem:[#allocation7 + $0x338] sm:$0xff]
        %v429 = vld [vmem:[#allocation7 + $0x340] sm:$0xff]
        %v430 = vld [vmem:[#allocation7 + $0x348] sm:$0xff]
        %v431 = vld [vmem:[#allocation7 + $0x350] sm:$0xff]
        %v432 = vld [vmem:[#allocation7 + $0x358] sm:$0xff]
        %v433 = vld [vmem:[#allocation7 + $0x360] sm:$0xff]
        %v434 = vld [vmem:[#allocation7 + $0x368] sm:$0xff]
        %v435 = vld [vmem:[#allocation7 + $0x370] sm:$0xff]
        %v436 = vld [vmem:[#allocation7 + $0x378] sm:$0xff]
        %v437 = vld [vmem:[#allocation7 + $0x380] sm:$0xff]
        %v438 = vld [vmem:[#allocation7 + $0x388] sm:$0xff]
        %v439 = vld [vmem:[#allocation7 + $0x390] sm:$0xff]
        %v440 = vld [vmem:[#allocation7 + $0x398] sm:$0xff]
        %v441 = vld [vmem:[#allocation7 + $0x3a0] sm:$0xff]
        %v442 = vld [vmem:[#allocation7 + $0x3a8] sm:$0xff]
        %v443 = vld [vmem:[#allocation7 + $0x3b0] sm:$0xff]
        %v444 = vld [vmem:[#allocation7 + $0x3b8] sm:$0xff]
        %v445 = vld [vmem:[#allocation7 + $0x3c0] sm:$0xff]
        %v446 = vld [vmem:[#allocation7 + $0x3c8] sm:$0xff]
        %v447 = vld [vmem:[#allocation7 + $0x3d0] sm:$0xff]
        %v448 = vld [vmem:[#allocation7 + $0x3d8] sm:$0xff]
        %v449 = vld [vmem:[#allocation7 + $0x3e0] sm:$0xff]
        %v450 = vld [vmem:[#allocation7 + $0x3e8] sm:$0xff]
        %v451 = vld [vmem:[#allocation7 + $0x3f0] sm:$0xff]
        %v452 = vld [vmem:[#allocation7 + $0x3f8] sm:$0xff]
        %v453 = vld [vmem:[#allocation9] sm:$0xff]
        %v454 = vld [vmem:[#allocation9 + $0x8] sm:$0xff]
        %v457 = vlaneseq
        %v458 = vshrl.u32 %v457, 7
        %v459 = vsub.s32 0, %v458
        %v460 = vrot.slane %v453, %v459
        %v461 = vlaneseq
        %v462 = vshrl.u32 %v461, 7
        %v463 = vsub.s32 1, %v462
        %v464 = vrot.slane %v453, %v463
        %v465 = vlaneseq
        %v466 = vshrl.u32 %v465, 7
        %v467 = vsub.s32 2, %v466
        %v468 = vrot.slane %v453, %v467
        %v469 = vlaneseq
        %v470 = vshrl.u32 %v469, 7
        %v471 = vsub.s32 3, %v470
        %v472 = vrot.slane %v453, %v471
        %v473 = vlaneseq
        %v474 = vshrl.u32 %v473, 7
        %v475 = vsub.s32 4, %v474
        %v476 = vrot.slane %v453, %v475
        %v477 = vlaneseq
        %v478 = vshrl.u32 %v477, 7
        %v479 = vsub.s32 5, %v478
        %v480 = vrot.slane %v453, %v479
        %v481 = vlaneseq
        %v482 = vshrl.u32 %v481, 7
        %v483 = vsub.s32 6, %v482
        %v484 = vrot.slane %v453, %v483
        %v485 = vlaneseq
        %v486 = vshrl.u32 %v485, 7
        %v487 = vsub.s32 7, %v486
        %v488 = vrot.slane %v453, %v487
        %v489 = vlaneseq
        %v490 = vshrl.u32 %v489, 7
        %v491 = vsub.s32 0, %v490
        %v492 = vrot.slane %v454, %v491
        %v493 = vlaneseq
        %v494 = vshrl.u32 %v493, 7
        %v495 = vsub.s32 1, %v494
        %v496 = vrot.slane %v454, %v495
        %v497 = vlaneseq
        %v498 = vshrl.u32 %v497, 7
        %v499 = vsub.s32 2, %v498
        %v500 = vrot.slane %v454, %v499
        %v501 = vlaneseq
        %v502 = vshrl.u32 %v501, 7
        %v503 = vsub.s32 3, %v502
        %v504 = vrot.slane %v454, %v503
        %v505 = vlaneseq
        %v506 = vshrl.u32 %v505, 7
        %v507 = vsub.s32 4, %v506
        %v508 = vrot.slane %v454, %v507
        %v509 = vlaneseq
        %v510 = vshrl.u32 %v509, 7
        %v511 = vsub.s32 5, %v510
        %v512 = vrot.slane %v454, %v511
        %v513 = vlaneseq
        %v514 = vshrl.u32 %v513, 7
        %v515 = vsub.s32 6, %v514
        %v516 = vrot.slane %v454, %v515
        %v517 = vlaneseq
        %v518 = vshrl.u32 %v517, 7
        %v519 = vsub.s32 7, %v518
        %v520 = vrot.slane %v454, %v519
        %v665 = vunpack.c.l.b16 %v325
        %v666 = vunpack.c.h.b16 %v325
        %v667 = vunpack.c.l.b16 %v326
        %v668 = vunpack.c.h.b16 %v326
        %v669 = vunpack.c.l.b16 %v327
        %v670 = vunpack.c.h.b16 %v327
        %v671 = vunpack.c.l.b16 %v328
        %v672 = vunpack.c.h.b16 %v328
        %v673 = vunpack.c.l.b16 %v329
        %v674 = vunpack.c.h.b16 %v329
        %v675 = vunpack.c.l.b16 %v330
        %v676 = vunpack.c.h.b16 %v330
        %v677 = vunpack.c.l.b16 %v331
        %v678 = vunpack.c.h.b16 %v331
        %v679 = vunpack.c.l.b16 %v332
        %v680 = vunpack.c.h.b16 %v332
        %v681 = vunpack.c.l.b16 %v333
        %v682 = vunpack.c.h.b16 %v333
        %v683 = vunpack.c.l.b16 %v334
        %v684 = vunpack.c.h.b16 %v334
        %v685 = vunpack.c.l.b16 %v335
        %v686 = vunpack.c.h.b16 %v335
        %v687 = vunpack.c.l.b16 %v336
        %v688 = vunpack.c.h.b16 %v336
        %v689 = vunpack.c.l.b16 %v337
        %v690 = vunpack.c.h.b16 %v337
        %v691 = vunpack.c.l.b16 %v338
        %v692 = vunpack.c.h.b16 %v338
        %v693 = vunpack.c.l.b16 %v339
        %v694 = vunpack.c.h.b16 %v339
        %v695 = vunpack.c.l.b16 %v340
        %v696 = vunpack.c.h.b16 %v340
        %v697 = vunpack.c.l.b16 %v341
        %v698 = vunpack.c.h.b16 %v341
        %v699 = vunpack.c.l.b16 %v342
        %v700 = vunpack.c.h.b16 %v342
        %v701 = vunpack.c.l.b16 %v343
        %v702 = vunpack.c.h.b16 %v343
        %v703 = vunpack.c.l.b16 %v344
        %v704 = vunpack.c.h.b16 %v344
        %v705 = vunpack.c.l.b16 %v345
        %v706 = vunpack.c.h.b16 %v345
        %v707 = vunpack.c.l.b16 %v346
        %v708 = vunpack.c.h.b16 %v346
        %v709 = vunpack.c.l.b16 %v347
        %v710 = vunpack.c.h.b16 %v347
        %v711 = vunpack.c.l.b16 %v348
        %v712 = vunpack.c.h.b16 %v348
        %v713 = vunpack.c.l.b16 %v349
        %v714 = vunpack.c.h.b16 %v349
        %v715 = vunpack.c.l.b16 %v350
        %v716 = vunpack.c.h.b16 %v350
        %v717 = vunpack.c.l.b16 %v351
        %v718 = vunpack.c.h.b16 %v351
        %v719 = vunpack.c.l.b16 %v352
        %v720 = vunpack.c.h.b16 %v352
        %v721 = vunpack.c.l.b16 %v353
        %v722 = vunpack.c.h.b16 %v353
        %v723 = vunpack.c.l.b16 %v354
        %v724 = vunpack.c.h.b16 %v354
        %v725 = vunpack.c.l.b16 %v355
        %v726 = vunpack.c.h.b16 %v355
        %v727 = vunpack.c.l.b16 %v356
        %v728 = vunpack.c.h.b16 %v356
        %v729 = vunpack.c.l.b16 %v357
        %v730 = vunpack.c.h.b16 %v357
        %v731 = vunpack.c.l.b16 %v358
        %v732 = vunpack.c.h.b16 %v358
        %v733 = vunpack.c.l.b16 %v359
        %v734 = vunpack.c.h.b16 %v359
        %v735 = vunpack.c.l.b16 %v360
        %v736 = vunpack.c.h.b16 %v360
        %v737 = vunpack.c.l.b16 %v361
        %v738 = vunpack.c.h.b16 %v361
        %v739 = vunpack.c.l.b16 %v362
        %v740 = vunpack.c.h.b16 %v362
        %v741 = vunpack.c.l.b16 %v363
        %v742 = vunpack.c.h.b16 %v363
        %v743 = vunpack.c.l.b16 %v364
        %v744 = vunpack.c.h.b16 %v364
        %v745 = vunpack.c.l.b16 %v365
        %v746 = vunpack.c.h.b16 %v365
        %v747 = vunpack.c.l.b16 %v366
        %v748 = vunpack.c.h.b16 %v366
        %v749 = vunpack.c.l.b16 %v367
        %v750 = vunpack.c.h.b16 %v367
        %v751 = vunpack.c.l.b16 %v368
        %v752 = vunpack.c.h.b16 %v368
        %v753 = vunpack.c.l.b16 %v369
        %v754 = vunpack.c.h.b16 %v369
        %v755 = vunpack.c.l.b16 %v370
        %v756 = vunpack.c.h.b16 %v370
        %v757 = vunpack.c.l.b16 %v371
        %v758 = vunpack.c.h.b16 %v371
        %v759 = vunpack.c.l.b16 %v372
        %v760 = vunpack.c.h.b16 %v372
        %v761 = vunpack.c.l.b16 %v373
        %v762 = vunpack.c.h.b16 %v373
        %v763 = vunpack.c.l.b16 %v374
        %v764 = vunpack.c.h.b16 %v374
        %v765 = vunpack.c.l.b16 %v375
        %v766 = vunpack.c.h.b16 %v375
        %v767 = vunpack.c.l.b16 %v376
        %v768 = vunpack.c.h.b16 %v376
        %v769 = vunpack.c.l.b16 %v377
        %v770 = vunpack.c.h.b16 %v377
        %v771 = vunpack.c.l.b16 %v378
        %v772 = vunpack.c.h.b16 %v378
        %v773 = vunpack.c.l.b16 %v379
        %v774 = vunpack.c.h.b16 %v379
        %v775 = vunpack.c.l.b16 %v380
        %v776 = vunpack.c.h.b16 %v380
        %v777 = vunpack.c.l.b16 %v381
        %v778 = vunpack.c.h.b16 %v381
        %v779 = vunpack.c.l.b16 %v382
        %v780 = vunpack.c.h.b16 %v382
        %v781 = vunpack.c.l.b16 %v383
        %v782 = vunpack.c.h.b16 %v383
        %v783 = vunpack.c.l.b16 %v384
        %v784 = vunpack.c.h.b16 %v384
        %v785 = vunpack.c.l.b16 %v385
        %v786 = vunpack.c.h.b16 %v385
        %v787 = vunpack.c.l.b16 %v386
        %v788 = vunpack.c.h.b16 %v386
        %v789 = vunpack.c.l.b16 %v387
        %v790 = vunpack.c.h.b16 %v387
        %v791 = vunpack.c.l.b16 %v388
        %v792 = vunpack.c.h.b16 %v388
        %v793 = vunpack.c.l.b16 %v389
        %v794 = vunpack.c.h.b16 %v389
        %v795 = vunpack.c.l.b16 %v390
        %v796 = vunpack.c.h.b16 %v390
        %v797 = vunpack.c.l.b16 %v391
        %v798 = vunpack.c.h.b16 %v391
        %v799 = vunpack.c.l.b16 %v392
        %v800 = vunpack.c.h.b16 %v392
        %v801 = vunpack.c.l.b16 %v393
        %v802 = vunpack.c.h.b16 %v393
        %v803 = vunpack.c.l.b16 %v394
        %v804 = vunpack.c.h.b16 %v394
        %v805 = vunpack.c.l.b16 %v395
        %v806 = vunpack.c.h.b16 %v395
        %v807 = vunpack.c.l.b16 %v396
        %v808 = vunpack.c.h.b16 %v396
        %v809 = vunpack.c.l.b16 %v397
        %v810 = vunpack.c.h.b16 %v397
        %v811 = vunpack.c.l.b16 %v398
        %v812 = vunpack.c.h.b16 %v398
        %v813 = vunpack.c.l.b16 %v399
        %v814 = vunpack.c.h.b16 %v399
        %v815 = vunpack.c.l.b16 %v400
        %v816 = vunpack.c.h.b16 %v400
        %v817 = vunpack.c.l.b16 %v401
        %v818 = vunpack.c.h.b16 %v401
        %v819 = vunpack.c.l.b16 %v402
        %v820 = vunpack.c.h.b16 %v402
        %v821 = vunpack.c.l.b16 %v403
        %v822 = vunpack.c.h.b16 %v403
        %v823 = vunpack.c.l.b16 %v404
        %v824 = vunpack.c.h.b16 %v404
        %v825 = vunpack.c.l.b16 %v405
        %v826 = vunpack.c.h.b16 %v405
        %v827 = vunpack.c.l.b16 %v406
        %v828 = vunpack.c.h.b16 %v406
        %v829 = vunpack.c.l.b16 %v407
        %v830 = vunpack.c.h.b16 %v407
        %v831 = vunpack.c.l.b16 %v408
        %v832 = vunpack.c.h.b16 %v408
        %v833 = vunpack.c.l.b16 %v409
        %v834 = vunpack.c.h.b16 %v409
        %v835 = vunpack.c.l.b16 %v410
        %v836 = vunpack.c.h.b16 %v410
        %v837 = vunpack.c.l.b16 %v411
        %v838 = vunpack.c.h.b16 %v411
        %v839 = vunpack.c.l.b16 %v412
        %v840 = vunpack.c.h.b16 %v412
        %v841 = vunpack.c.l.b16 %v413
        %v842 = vunpack.c.h.b16 %v413
        %v843 = vunpack.c.l.b16 %v414
        %v844 = vunpack.c.h.b16 %v414
        %v845 = vunpack.c.l.b16 %v415
        %v846 = vunpack.c.h.b16 %v415
        %v847 = vunpack.c.l.b16 %v416
        %v848 = vunpack.c.h.b16 %v416
        %v849 = vunpack.c.l.b16 %v417
        %v850 = vunpack.c.h.b16 %v417
        %v851 = vunpack.c.l.b16 %v418
        %v852 = vunpack.c.h.b16 %v418
        %v853 = vunpack.c.l.b16 %v419
        %v854 = vunpack.c.h.b16 %v419
        %v855 = vunpack.c.l.b16 %v420
        %v856 = vunpack.c.h.b16 %v420
        %v857 = vunpack.c.l.b16 %v421
        %v858 = vunpack.c.h.b16 %v421
        %v859 = vunpack.c.l.b16 %v422
        %v860 = vunpack.c.h.b16 %v422
        %v861 = vunpack.c.l.b16 %v423
        %v862 = vunpack.c.h.b16 %v423
        %v863 = vunpack.c.l.b16 %v424
        %v864 = vunpack.c.h.b16 %v424
        %v865 = vunpack.c.l.b16 %v425
        %v866 = vunpack.c.h.b16 %v425
        %v867 = vunpack.c.l.b16 %v426
        %v868 = vunpack.c.h.b16 %v426
        %v869 = vunpack.c.l.b16 %v427
        %v870 = vunpack.c.h.b16 %v427
        %v871 = vunpack.c.l.b16 %v428
        %v872 = vunpack.c.h.b16 %v428
        %v873 = vunpack.c.l.b16 %v429
        %v874 = vunpack.c.h.b16 %v429
        %v875 = vunpack.c.l.b16 %v430
        %v876 = vunpack.c.h.b16 %v430
        %v877 = vunpack.c.l.b16 %v431
        %v878 = vunpack.c.h.b16 %v431
        %v879 = vunpack.c.l.b16 %v432
        %v880 = vunpack.c.h.b16 %v432
        %v881 = vunpack.c.l.b16 %v433
        %v882 = vunpack.c.h.b16 %v433
        %v883 = vunpack.c.l.b16 %v434
        %v884 = vunpack.c.h.b16 %v434
        %v885 = vunpack.c.l.b16 %v435
        %v886 = vunpack.c.h.b16 %v435
        %v887 = vunpack.c.l.b16 %v436
        %v888 = vunpack.c.h.b16 %v436
        %v889 = vunpack.c.l.b16 %v437
        %v890 = vunpack.c.h.b16 %v437
        %v891 = vunpack.c.l.b16 %v438
        %v892 = vunpack.c.h.b16 %v438
        %v893 = vunpack.c.l.b16 %v439
        %v894 = vunpack.c.h.b16 %v439
        %v895 = vunpack.c.l.b16 %v440
        %v896 = vunpack.c.h.b16 %v440
        %v897 = vunpack.c.l.b16 %v441
        %v898 = vunpack.c.h.b16 %v441
        %v899 = vunpack.c.l.b16 %v442
        %v900 = vunpack.c.h.b16 %v442
        %v901 = vunpack.c.l.b16 %v443
        %v902 = vunpack.c.h.b16 %v443
        %v903 = vunpack.c.l.b16 %v444
        %v904 = vunpack.c.h.b16 %v444
        %v905 = vunpack.c.l.b16 %v445
        %v906 = vunpack.c.h.b16 %v445
        %v907 = vunpack.c.l.b16 %v446
        %v908 = vunpack.c.h.b16 %v446
        %v909 = vunpack.c.l.b16 %v447
        %v910 = vunpack.c.h.b16 %v447
        %v911 = vunpack.c.l.b16 %v448
        %v912 = vunpack.c.h.b16 %v448
        %v913 = vunpack.c.l.b16 %v449
        %v914 = vunpack.c.h.b16 %v449
        %v915 = vunpack.c.l.b16 %v450
        %v916 = vunpack.c.h.b16 %v450
        %v917 = vunpack.c.l.b16 %v451
        %v918 = vunpack.c.h.b16 %v451
        %v919 = vunpack.c.l.b16 %v452
        %v920 = vunpack.c.h.b16 %v452
        %v921 = vpack.c.b16 %v681, %v665
        %v922 = vpack.c.b16 %v682, %v666
        %v923 = vpack.c.b16 %v683, %v667
        %v924 = vpack.c.b16 %v684, %v668
        %v925 = vpack.c.b16 %v685, %v669
        %v926 = vpack.c.b16 %v686, %v670
        %v927 = vpack.c.b16 %v687, %v671
        %v928 = vpack.c.b16 %v688, %v672
        %v929 = vpack.c.b16 %v689, %v673
        %v930 = vpack.c.b16 %v690, %v674
        %v931 = vpack.c.b16 %v691, %v675
        %v932 = vpack.c.b16 %v692, %v676
        %v933 = vpack.c.b16 %v693, %v677
        %v934 = vpack.c.b16 %v694, %v678
        %v935 = vpack.c.b16 %v695, %v679
        %v936 = vpack.c.b16 %v696, %v680
        %v937 = vpack.c.b16 %v713, %v697
        %v938 = vpack.c.b16 %v714, %v698
        %v939 = vpack.c.b16 %v715, %v699
        %v940 = vpack.c.b16 %v716, %v700
        %v941 = vpack.c.b16 %v717, %v701
        %v942 = vpack.c.b16 %v718, %v702
        %v943 = vpack.c.b16 %v719, %v703
        %v944 = vpack.c.b16 %v720, %v704
        %v945 = vpack.c.b16 %v721, %v705
        %v946 = vpack.c.b16 %v722, %v706
        %v947 = vpack.c.b16 %v723, %v707
        %v948 = vpack.c.b16 %v724, %v708
        %v949 = vpack.c.b16 %v725, %v709
        %v950 = vpack.c.b16 %v726, %v710
        %v951 = vpack.c.b16 %v727, %v711
        %v952 = vpack.c.b16 %v728, %v712
        %v953 = vpack.c.b16 %v745, %v729
        %v954 = vpack.c.b16 %v746, %v730
        %v955 = vpack.c.b16 %v747, %v731
        %v956 = vpack.c.b16 %v748, %v732
        %v957 = vpack.c.b16 %v749, %v733
        %v958 = vpack.c.b16 %v750, %v734
        %v959 = vpack.c.b16 %v751, %v735
        %v960 = vpack.c.b16 %v752, %v736
        %v961 = vpack.c.b16 %v753, %v737
        %v962 = vpack.c.b16 %v754, %v738
        %v963 = vpack.c.b16 %v755, %v739
        %v964 = vpack.c.b16 %v756, %v740
        %v965 = vpack.c.b16 %v757, %v741
        %v966 = vpack.c.b16 %v758, %v742
        %v967 = vpack.c.b16 %v759, %v743
        %v968 = vpack.c.b16 %v760, %v744
        %v969 = vpack.c.b16 %v777, %v761
        %v970 = vpack.c.b16 %v778, %v762
        %v971 = vpack.c.b16 %v779, %v763
        %v972 = vpack.c.b16 %v780, %v764
        %v973 = vpack.c.b16 %v781, %v765
        %v974 = vpack.c.b16 %v782, %v766
        %v975 = vpack.c.b16 %v783, %v767
        %v976 = vpack.c.b16 %v784, %v768
        %v977 = vpack.c.b16 %v785, %v769
        %v978 = vpack.c.b16 %v786, %v770
        %v979 = vpack.c.b16 %v787, %v771
        %v980 = vpack.c.b16 %v788, %v772
        %v981 = vpack.c.b16 %v789, %v773
        %v982 = vpack.c.b16 %v790, %v774
        %v983 = vpack.c.b16 %v791, %v775
        %v984 = vpack.c.b16 %v792, %v776
        %v985 = vpack.c.b16 %v809, %v793
        %v986 = vpack.c.b16 %v810, %v794
        %v987 = vpack.c.b16 %v811, %v795
        %v988 = vpack.c.b16 %v812, %v796
        %v989 = vpack.c.b16 %v813, %v797
        %v990 = vpack.c.b16 %v814, %v798
        %v991 = vpack.c.b16 %v815, %v799
        %v992 = vpack.c.b16 %v816, %v800
        %v993 = vpack.c.b16 %v817, %v801
        %v994 = vpack.c.b16 %v818, %v802
        %v995 = vpack.c.b16 %v819, %v803
        %v996 = vpack.c.b16 %v820, %v804
        %v997 = vpack.c.b16 %v821, %v805
        %v998 = vpack.c.b16 %v822, %v806
        %v999 = vpack.c.b16 %v823, %v807
        %v1000 = vpack.c.b16 %v824, %v808
        %v1001 = vpack.c.b16 %v841, %v825
        %v1002 = vpack.c.b16 %v842, %v826
        %v1003 = vpack.c.b16 %v843, %v827
        %v1004 = vpack.c.b16 %v844, %v828
        %v1005 = vpack.c.b16 %v845, %v829
        %v1006 = vpack.c.b16 %v846, %v830
        %v1007 = vpack.c.b16 %v847, %v831
        %v1008 = vpack.c.b16 %v848, %v832
        %v1009 = vpack.c.b16 %v849, %v833
        %v1010 = vpack.c.b16 %v850, %v834
        %v1011 = vpack.c.b16 %v851, %v835
        %v1012 = vpack.c.b16 %v852, %v836
        %v1013 = vpack.c.b16 %v853, %v837
        %v1014 = vpack.c.b16 %v854, %v838
        %v1015 = vpack.c.b16 %v855, %v839
        %v1016 = vpack.c.b16 %v856, %v840
        %v1017 = vpack.c.b16 %v873, %v857
        %v1018 = vpack.c.b16 %v874, %v858
        %v1019 = vpack.c.b16 %v875, %v859
        %v1020 = vpack.c.b16 %v876, %v860
        %v1021 = vpack.c.b16 %v877, %v861
        %v1022 = vpack.c.b16 %v878, %v862
        %v1023 = vpack.c.b16 %v879, %v863
        %v1024 = vpack.c.b16 %v880, %v864
        %v1025 = vpack.c.b16 %v881, %v865
        %v1026 = vpack.c.b16 %v882, %v866
        %v1027 = vpack.c.b16 %v883, %v867
        %v1028 = vpack.c.b16 %v884, %v868
        %v1029 = vpack.c.b16 %v885, %v869
        %v1030 = vpack.c.b16 %v886, %v870
        %v1031 = vpack.c.b16 %v887, %v871
        %v1032 = vpack.c.b16 %v888, %v872
        %v1033 = vpack.c.b16 %v905, %v889
        %v1034 = vpack.c.b16 %v906, %v890
        %v1035 = vpack.c.b16 %v907, %v891
        %v1036 = vpack.c.b16 %v908, %v892
        %v1037 = vpack.c.b16 %v909, %v893
        %v1038 = vpack.c.b16 %v910, %v894
        %v1039 = vpack.c.b16 %v911, %v895
        %v1040 = vpack.c.b16 %v912, %v896
        %v1041 = vpack.c.b16 %v913, %v897
        %v1042 = vpack.c.b16 %v914, %v898
        %v1043 = vpack.c.b16 %v915, %v899
        %v1044 = vpack.c.b16 %v916, %v900
        %v1045 = vpack.c.b16 %v917, %v901
        %v1046 = vpack.c.b16 %v918, %v902
        %v1047 = vpack.c.b16 %v919, %v903
        %v1048 = vpack.c.b16 %v920, %v904
        %1177 = vmatprep.subr.bf16.mxu0 %v1034
        %1178 = vmatpush1.bf16.msra.mxu0 %v1033
        %1179 = vmatprep.subr.bf16.mxu0 %v1018
        %1180 = vmatpush1.bf16.msra.mxu0 %v1017
        %1181 = vmatprep.subr.bf16.mxu0 %v1002
        %1182 = vmatpush1.bf16.msra.mxu0 %v1001
        %1183 = vmatprep.subr.bf16.mxu0 %v986
        %1184 = vmatpush1.bf16.msra.mxu0 %v985
        %1185 = vmatprep.subr.bf16.mxu0 %v970
        %1186 = vmatpush1.bf16.msra.mxu0 %v969
        %1187 = vmatprep.subr.bf16.mxu0 %v954
        %1188 = vmatpush1.bf16.msra.mxu0 %v953
        %1189 = vmatprep.subr.bf16.mxu0 %v938
        %1190 = vmatpush1.bf16.msra.mxu0 %v937
        %1191 = vmatprep.subr.bf16.mxu0 %v922
        %1192 = vmatpush1.bf16.msra.mxu0 %v921
        %1193 = vmatprep.subr.bf16.mxu0 0
        %1194 = vmatpush2.bf16.msra.mxu0 0
        %1195 = vmatprep.subr.bf16.mxu0 0
        %1196 = vmatpush2.bf16.msra.mxu0 0
        %1197 = vmatprep.subr.bf16.mxu0 0
        %1198 = vmatpush2.bf16.msra.mxu0 0
        %1199 = vmatprep.subr.bf16.mxu0 0
        %1200 = vmatpush2.bf16.msra.mxu0 0
        %1201 = vmatprep.subr.bf16.mxu0 0
        %1202 = vmatpush2.bf16.msra.mxu0 0
        %1203 = vmatprep.subr.bf16.mxu0 0
        %1204 = vmatpush2.bf16.msra.mxu0 0
        %1205 = vmatprep.subr.bf16.mxu0 0
        %1206 = vmatpush2.bf16.msra.mxu0 0
        %1207 = vmatprep.subr.bf16.mxu0 0
        %1208 = vmatpush2.bf16.msra.mxu0 0
        %1209 = vmatprep.mubr.bf16.mxu0 0
        %1210 = vmatmul.mubr.bf16.gmra.mxu0 %v324
        %v1211 = vpop.f32.mrf.mxu0
        %v1212 = vadd.f32 %v460, %v1211
        %v1213 = vpop.f32.mrf.mxu0
        %v1214 = vadd.f32 %v464, %v1213
        %v1215 = vpop.f32.mrf.mxu0
        %v1216 = vpop.f32.mrf.mxu0
        %1217 = vdwg.mxu0
        %1218 = vmatprep.subr.bf16.mxu0 %v1036
        %1219 = vmatpush1.bf16.msra.mxu0 %v1035
        %1220 = vmatprep.subr.bf16.mxu0 %v1020
        %1221 = vmatpush1.bf16.msra.mxu0 %v1019
        %1222 = vmatprep.subr.bf16.mxu0 %v1004
        %1223 = vmatpush1.bf16.msra.mxu0 %v1003
        %1224 = vmatprep.subr.bf16.mxu0 %v988
        %1225 = vmatpush1.bf16.msra.mxu0 %v987
        %1226 = vmatprep.subr.bf16.mxu0 %v972
        %1227 = vmatpush1.bf16.msra.mxu0 %v971
        %1228 = vmatprep.subr.bf16.mxu0 %v956
        %1229 = vmatpush1.bf16.msra.mxu0 %v955
        %1230 = vmatprep.subr.bf16.mxu0 %v940
        %1231 = vmatpush1.bf16.msra.mxu0 %v939
        %1232 = vmatprep.subr.bf16.mxu0 %v924
        %1233 = vmatpush1.bf16.msra.mxu0 %v923
        %1234 = vmatprep.subr.bf16.mxu0 0
        %1235 = vmatpush2.bf16.msra.mxu0 0
        %1236 = vmatprep.subr.bf16.mxu0 0
        %1237 = vmatpush2.bf16.msra.mxu0 0
        %1238 = vmatprep.subr.bf16.mxu0 0
        %1239 = vmatpush2.bf16.msra.mxu0 0
        %1240 = vmatprep.subr.bf16.mxu0 0
        %1241 = vmatpush2.bf16.msra.mxu0 0
        %1242 = vmatprep.subr.bf16.mxu0 0
        %1243 = vmatpush2.bf16.msra.mxu0 0
        %1244 = vmatprep.subr.bf16.mxu0 0
        %1245 = vmatpush2.bf16.msra.mxu0 0
        %1246 = vmatprep.subr.bf16.mxu0 0
        %1247 = vmatpush2.bf16.msra.mxu0 0
        %1248 = vmatprep.subr.bf16.mxu0 0
        %1249 = vmatpush2.bf16.msra.mxu0 0
        %1250 = vmatprep.mubr.bf16.mxu0 0
        %1251 = vmatmul.mubr.bf16.gmra.mxu0 %v324
        %v1252 = vpop.f32.mrf.mxu0
        %v1253 = vadd.f32 %v468, %v1252
        %v1254 = vpop.f32.mrf.mxu0
        %v1255 = vadd.f32 %v472, %v1254
        %v1256 = vpop.f32.mrf.mxu0
        %v1257 = vpop.f32.mrf.mxu0
        %1258 = vdwg.mxu0
        %1259 = vmatprep.subr.bf16.mxu0 %v1038
        %1260 = vmatpush1.bf16.msra.mxu0 %v1037
        %1261 = vmatprep.subr.bf16.mxu0 %v1022
        %1262 = vmatpush1.bf16.msra.mxu0 %v1021
        %1263 = vmatprep.subr.bf16.mxu0 %v1006
        %1264 = vmatpush1.bf16.msra.mxu0 %v1005
        %1265 = vmatprep.subr.bf16.mxu0 %v990
        %1266 = vmatpush1.bf16.msra.mxu0 %v989
        %1267 = vmatprep.subr.bf16.mxu0 %v974
        %1268 = vmatpush1.bf16.msra.mxu0 %v973
        %1269 = vmatprep.subr.bf16.mxu0 %v958
        %1270 = vmatpush1.bf16.msra.mxu0 %v957
        %1271 = vmatprep.subr.bf16.mxu0 %v942
        %1272 = vmatpush1.bf16.msra.mxu0 %v941
        %1273 = vmatprep.subr.bf16.mxu0 %v926
        %1274 = vmatpush1.bf16.msra.mxu0 %v925
        %1275 = vmatprep.subr.bf16.mxu0 0
        %1276 = vmatpush2.bf16.msra.mxu0 0
        %1277 = vmatprep.subr.bf16.mxu0 0
        %1278 = vmatpush2.bf16.msra.mxu0 0
        %1279 = vmatprep.subr.bf16.mxu0 0
        %1280 = vmatpush2.bf16.msra.mxu0 0
        %1281 = vmatprep.subr.bf16.mxu0 0
        %1282 = vmatpush2.bf16.msra.mxu0 0
        %1283 = vmatprep.subr.bf16.mxu0 0
        %1284 = vmatpush2.bf16.msra.mxu0 0
        %1285 = vmatprep.subr.bf16.mxu0 0
        %1286 = vmatpush2.bf16.msra.mxu0 0
        %1287 = vmatprep.subr.bf16.mxu0 0
        %1288 = vmatpush2.bf16.msra.mxu0 0
        %1289 = vmatprep.subr.bf16.mxu0 0
        %1290 = vmatpush2.bf16.msra.mxu0 0
        %1291 = vmatprep.mubr.bf16.mxu0 0
        %1292 = vmatmul.mubr.bf16.gmra.mxu0 %v324
        %v1293 = vpop.f32.mrf.mxu0
        %v1294 = vadd.f32 %v476, %v1293
        %v1295 = vpop.f32.mrf.mxu0
        %v1296 = vadd.f32 %v480, %v1295
        %v1297 = vpop.f32.mrf.mxu0
        %v1298 = vpop.f32.mrf.mxu0
        %1299 = vdwg.mxu0
        %1300 = vmatprep.subr.bf16.mxu0 %v1040
        %1301 = vmatpush1.bf16.msra.mxu0 %v1039
        %1302 = vmatprep.subr.bf16.mxu0 %v1024
        %1303 = vmatpush1.bf16.msra.mxu0 %v1023
        %1304 = vmatprep.subr.bf16.mxu0 %v1008
        %1305 = vmatpush1.bf16.msra.mxu0 %v1007
        %1306 = vmatprep.subr.bf16.mxu0 %v992
        %1307 = vmatpush1.bf16.msra.mxu0 %v991
        %1308 = vmatprep.subr.bf16.mxu0 %v976
        %1309 = vmatpush1.bf16.msra.mxu0 %v975
        %1310 = vmatprep.subr.bf16.mxu0 %v960
        %1311 = vmatpush1.bf16.msra.mxu0 %v959
        %1312 = vmatprep.subr.bf16.mxu0 %v944
        %1313 = vmatpush1.bf16.msra.mxu0 %v943
        %1314 = vmatprep.subr.bf16.mxu0 %v928
        %1315 = vmatpush1.bf16.msra.mxu0 %v927
        %1316 = vmatprep.subr.bf16.mxu0 0
        %1317 = vmatpush2.bf16.msra.mxu0 0
        %1318 = vmatprep.subr.bf16.mxu0 0
        %1319 = vmatpush2.bf16.msra.mxu0 0
        %1320 = vmatprep.subr.bf16.mxu0 0
        %1321 = vmatpush2.bf16.msra.mxu0 0
        %1322 = vmatprep.subr.bf16.mxu0 0
        %1323 = vmatpush2.bf16.msra.mxu0 0
        %1324 = vmatprep.subr.bf16.mxu0 0
        %1325 = vmatpush2.bf16.msra.mxu0 0
        %1326 = vmatprep.subr.bf16.mxu0 0
        %1327 = vmatpush2.bf16.msra.mxu0 0
        %1328 = vmatprep.subr.bf16.mxu0 0
        %1329 = vmatpush2.bf16.msra.mxu0 0
        %1330 = vmatprep.subr.bf16.mxu0 0
        %1331 = vmatpush2.bf16.msra.mxu0 0
        %1332 = vmatprep.mubr.bf16.mxu0 0
        %1333 = vmatmul.mubr.bf16.gmra.mxu0 %v324
        %v1334 = vpop.f32.mrf.mxu0
        %v1335 = vadd.f32 %v484, %v1334
        %v1336 = vpop.f32.mrf.mxu0
        %v1337 = vadd.f32 %v488, %v1336
        %v1338 = vpop.f32.mrf.mxu0
        %v1339 = vpop.f32.mrf.mxu0
        %1340 = vdwg.mxu0
        %1341 = vmatprep.subr.bf16.mxu0 %v1042
        %1342 = vmatpush1.bf16.msra.mxu0 %v1041
        %1343 = vmatprep.subr.bf16.mxu0 %v1026
        %1344 = vmatpush1.bf16.msra.mxu0 %v1025
        %1345 = vmatprep.subr.bf16.mxu0 %v1010
        %1346 = vmatpush1.bf16.msra.mxu0 %v1009
        %1347 = vmatprep.subr.bf16.mxu0 %v994
        %1348 = vmatpush1.bf16.msra.mxu0 %v993
        %1349 = vmatprep.subr.bf16.mxu0 %v978
        %1350 = vmatpush1.bf16.msra.mxu0 %v977
        %1351 = vmatprep.subr.bf16.mxu0 %v962
        %1352 = vmatpush1.bf16.msra.mxu0 %v961
        %1353 = vmatprep.subr.bf16.mxu0 %v946
        %1354 = vmatpush1.bf16.msra.mxu0 %v945
        %1355 = vmatprep.subr.bf16.mxu0 %v930
        %1356 = vmatpush1.bf16.msra.mxu0 %v929
        %1357 = vmatprep.subr.bf16.mxu0 0
        %1358 = vmatpush2.bf16.msra.mxu0 0
        %1359 = vmatprep.subr.bf16.mxu0 0
        %1360 = vmatpush2.bf16.msra.mxu0 0
        %1361 = vmatprep.subr.bf16.mxu0 0
        %1362 = vmatpush2.bf16.msra.mxu0 0
        %1363 = vmatprep.subr.bf16.mxu0 0
        %1364 = vmatpush2.bf16.msra.mxu0 0
        %1365 = vmatprep.subr.bf16.mxu0 0
        %1366 = vmatpush2.bf16.msra.mxu0 0
        %1367 = vmatprep.subr.bf16.mxu0 0
        %1368 = vmatpush2.bf16.msra.mxu0 0
        %1369 = vmatprep.subr.bf16.mxu0 0
        %1370 = vmatpush2.bf16.msra.mxu0 0
        %1371 = vmatprep.subr.bf16.mxu0 0
        %1372 = vmatpush2.bf16.msra.mxu0 0
        %1373 = vmatprep.mubr.bf16.mxu0 0
        %1374 = vmatmul.mubr.bf16.gmra.mxu0 %v324
        %v1375 = vpop.f32.mrf.mxu0
        %v1376 = vadd.f32 %v492, %v1375
        %v1377 = vpop.f32.mrf.mxu0
        %v1378 = vadd.f32 %v496, %v1377
        %v1379 = vpop.f32.mrf.mxu0
        %v1380 = vpop.f32.mrf.mxu0
        %1381 = vdwg.mxu0
        %1382 = vmatprep.subr.bf16.mxu0 %v1044
        %1383 = vmatpush1.bf16.msra.mxu0 %v1043
        %1384 = vmatprep.subr.bf16.mxu0 %v1028
        %1385 = vmatpush1.bf16.msra.mxu0 %v1027
        %1386 = vmatprep.subr.bf16.mxu0 %v1012
        %1387 = vmatpush1.bf16.msra.mxu0 %v1011
        %1388 = vmatprep.subr.bf16.mxu0 %v996
        %1389 = vmatpush1.bf16.msra.mxu0 %v995
        %1390 = vmatprep.subr.bf16.mxu0 %v980
        %1391 = vmatpush1.bf16.msra.mxu0 %v979
        %1392 = vmatprep.subr.bf16.mxu0 %v964
        %1393 = vmatpush1.bf16.msra.mxu0 %v963
        %1394 = vmatprep.subr.bf16.mxu0 %v948
        %1395 = vmatpush1.bf16.msra.mxu0 %v947
        %1396 = vmatprep.subr.bf16.mxu0 %v932
        %1397 = vmatpush1.bf16.msra.mxu0 %v931
        %1398 = vmatprep.subr.bf16.mxu0 0
        %1399 = vmatpush2.bf16.msra.mxu0 0
        %1400 = vmatprep.subr.bf16.mxu0 0
        %1401 = vmatpush2.bf16.msra.mxu0 0
        %1402 = vmatprep.subr.bf16.mxu0 0
        %1403 = vmatpush2.bf16.msra.mxu0 0
        %1404 = vmatprep.subr.bf16.mxu0 0
        %1405 = vmatpush2.bf16.msra.mxu0 0
        %1406 = vmatprep.subr.bf16.mxu0 0
        %1407 = vmatpush2.bf16.msra.mxu0 0
        %1408 = vmatprep.subr.bf16.mxu0 0
        %1409 = vmatpush2.bf16.msra.mxu0 0
        %1410 = vmatprep.subr.bf16.mxu0 0
        %1411 = vmatpush2.bf16.msra.mxu0 0
        %1412 = vmatprep.subr.bf16.mxu0 0
        %1413 = vmatpush2.bf16.msra.mxu0 0
        %1414 = vmatprep.mubr.bf16.mxu0 0
        %1415 = vmatmul.mubr.bf16.gmra.mxu0 %v324
        %v1416 = vpop.f32.mrf.mxu0
        %v1417 = vadd.f32 %v500, %v1416
        %v1418 = vpop.f32.mrf.mxu0
        %v1419 = vadd.f32 %v504, %v1418
        %v1420 = vpop.f32.mrf.mxu0
        %v1421 = vpop.f32.mrf.mxu0
        %1422 = vdwg.mxu0
        %1423 = vmatprep.subr.bf16.mxu0 %v1046
        %1424 = vmatpush1.bf16.msra.mxu0 %v1045
        %1425 = vmatprep.subr.bf16.mxu0 %v1030
        %1426 = vmatpush1.bf16.msra.mxu0 %v1029
        %1427 = vmatprep.subr.bf16.mxu0 %v1014
        %1428 = vmatpush1.bf16.msra.mxu0 %v1013
        %1429 = vmatprep.subr.bf16.mxu0 %v998
        %1430 = vmatpush1.bf16.msra.mxu0 %v997
        %1431 = vmatprep.subr.bf16.mxu0 %v982
        %1432 = vmatpush1.bf16.msra.mxu0 %v981
        %1433 = vmatprep.subr.bf16.mxu0 %v966
        %1434 = vmatpush1.bf16.msra.mxu0 %v965
        %1435 = vmatprep.subr.bf16.mxu0 %v950
        %1436 = vmatpush1.bf16.msra.mxu0 %v949
        %1437 = vmatprep.subr.bf16.mxu0 %v934
        %1438 = vmatpush1.bf16.msra.mxu0 %v933
        %1439 = vmatprep.subr.bf16.mxu0 0
        %1440 = vmatpush2.bf16.msra.mxu0 0
        %1441 = vmatprep.subr.bf16.mxu0 0
        %1442 = vmatpush2.bf16.msra.mxu0 0
        %1443 = vmatprep.subr.bf16.mxu0 0
        %1444 = vmatpush2.bf16.msra.mxu0 0
        %1445 = vmatprep.subr.bf16.mxu0 0
        %1446 = vmatpush2.bf16.msra.mxu0 0
        %1447 = vmatprep.subr.bf16.mxu0 0
        %1448 = vmatpush2.bf16.msra.mxu0 0
        %1449 = vmatprep.subr.bf16.mxu0 0
        %1450 = vmatpush2.bf16.msra.mxu0 0
        %1451 = vmatprep.subr.bf16.mxu0 0
        %1452 = vmatpush2.bf16.msra.mxu0 0
        %1453 = vmatprep.subr.bf16.mxu0 0
        %1454 = vmatpush2.bf16.msra.mxu0 0
        %1455 = vmatprep.mubr.bf16.mxu0 0
        %1456 = vmatmul.mubr.bf16.gmra.mxu0 %v324
        %v1457 = vpop.f32.mrf.mxu0
        %v1458 = vadd.f32 %v508, %v1457
        %v1459 = vpop.f32.mrf.mxu0
        %v1460 = vadd.f32 %v512, %v1459
        %v1461 = vpop.f32.mrf.mxu0
        %v1462 = vpop.f32.mrf.mxu0
        %1463 = vdwg.mxu0
        %1464 = vmatprep.subr.bf16.mxu0 %v1048
        %1465 = vmatpush1.bf16.msra.mxu0 %v1047
        %1466 = vmatprep.subr.bf16.mxu0 %v1032
        %1467 = vmatpush1.bf16.msra.mxu0 %v1031
        %1468 = vmatprep.subr.bf16.mxu0 %v1016
        %1469 = vmatpush1.bf16.msra.mxu0 %v1015
        %1470 = vmatprep.subr.bf16.mxu0 %v1000
        %1471 = vmatpush1.bf16.msra.mxu0 %v999
        %1472 = vmatprep.subr.bf16.mxu0 %v984
        %1473 = vmatpush1.bf16.msra.mxu0 %v983
        %1474 = vmatprep.subr.bf16.mxu0 %v968
        %1475 = vmatpush1.bf16.msra.mxu0 %v967
        %1476 = vmatprep.subr.bf16.mxu0 %v952
        %1477 = vmatpush1.bf16.msra.mxu0 %v951
        %1478 = vmatprep.subr.bf16.mxu0 %v936
        %1479 = vmatpush1.bf16.msra.mxu0 %v935
        %1480 = vmatprep.subr.bf16.mxu0 0
        %1481 = vmatpush2.bf16.msra.mxu0 0
        %1482 = vmatprep.subr.bf16.mxu0 0
        %1483 = vmatpush2.bf16.msra.mxu0 0
        %1484 = vmatprep.subr.bf16.mxu0 0
        %1485 = vmatpush2.bf16.msra.mxu0 0
        %1486 = vmatprep.subr.bf16.mxu0 0
        %1487 = vmatpush2.bf16.msra.mxu0 0
        %1488 = vmatprep.subr.bf16.mxu0 0
        %1489 = vmatpush2.bf16.msra.mxu0 0
        %1490 = vmatprep.subr.bf16.mxu0 0
        %1491 = vmatpush2.bf16.msra.mxu0 0
        %1492 = vmatprep.subr.bf16.mxu0 0
        %1493 = vmatpush2.bf16.msra.mxu0 0
        %1494 = vmatprep.subr.bf16.mxu0 0
        %1495 = vmatpush2.bf16.msra.mxu0 0
        %1496 = vmatprep.mubr.bf16.mxu0 0
        %1497 = vmatmul.mubr.bf16.gmra.mxu0 %v324
        %v1498 = vpop.f32.mrf.mxu0
        %v1499 = vadd.f32 %v516, %v1498
        %v1500 = vpop.f32.mrf.mxu0
        %v1501 = vadd.f32 %v520, %v1500
        %v1502 = vpop.f32.mrf.mxu0
        %v1503 = vpop.f32.mrf.mxu0
        %1504 = vdwg.mxu0
        %v1505 = vmax.f32 %v1212, 0.0
        %v1506 = vmax.f32 %v1214, 0.0
        %v1507 = vmax.f32 %v1253, 0.0
        %v1508 = vmax.f32 %v1255, 0.0
        %v1509 = vmax.f32 %v1294, 0.0
        %v1510 = vmax.f32 %v1296, 0.0
        %v1511 = vmax.f32 %v1335, 0.0
        %v1512 = vmax.f32 %v1337, 0.0
        %v1513 = vmax.f32 %v1376, 0.0
        %v1514 = vmax.f32 %v1378, 0.0
        %v1515 = vmax.f32 %v1417, 0.0
        %v1516 = vmax.f32 %v1419, 0.0
        %v1517 = vmax.f32 %v1458, 0.0
        %v1518 = vmax.f32 %v1460, 0.0
        %v1519 = vmax.f32 %v1499, 0.0
        %v1520 = vmax.f32 %v1501, 0.0
        %v1521 = vpack.c.bf16 %v1505, %v1505
        %v1522 = vpack.c.bf16 %v1506, %v1506
        %v1523 = vpack.c.bf16 %v1507, %v1507
        %v1524 = vpack.c.bf16 %v1508, %v1508
        %v1525 = vpack.c.bf16 %v1509, %v1509
        %v1526 = vpack.c.bf16 %v1510, %v1510
        %v1527 = vpack.c.bf16 %v1511, %v1511
        %v1528 = vpack.c.bf16 %v1512, %v1512
        %v1529 = vpack.c.bf16 %v1513, %v1513
        %v1530 = vpack.c.bf16 %v1514, %v1514
        %v1531 = vpack.c.bf16 %v1515, %v1515
        %v1532 = vpack.c.bf16 %v1516, %v1516
        %v1533 = vpack.c.bf16 %v1517, %v1517
        %v1534 = vpack.c.bf16 %v1518, %v1518
        %v1535 = vpack.c.bf16 %v1519, %v1519
        %v1536 = vpack.c.bf16 %v1520, %v1520
        %v1537 = vld [vmem:[#allocation10] sm:$0xf]
        %v1538 = vld [vmem:[#allocation10 + $0x4] sm:$0xf]
        %v1539 = vld [vmem:[#allocation10 + $0x8] sm:$0xf]
        %v1540 = vld [vmem:[#allocation10 + $0xc] sm:$0xf]
        %v1541 = vld [vmem:[#allocation10 + $0x10] sm:$0xf]
        %v1542 = vld [vmem:[#allocation10 + $0x14] sm:$0xf]
        %v1543 = vld [vmem:[#allocation10 + $0x18] sm:$0xf]
        %v1544 = vld [vmem:[#allocation10 + $0x1c] sm:$0xf]
        %v1545 = vld [vmem:[#allocation10 + $0x20] sm:$0xf]
        %v1546 = vld [vmem:[#allocation10 + $0x24] sm:$0xf]
        %v1547 = vld [vmem:[#allocation10 + $0x28] sm:$0xf]
        %v1548 = vld [vmem:[#allocation10 + $0x2c] sm:$0xf]
        %v1549 = vld [vmem:[#allocation10 + $0x30] sm:$0xf]
        %v1550 = vld [vmem:[#allocation10 + $0x34] sm:$0xf]
        %v1551 = vld [vmem:[#allocation10 + $0x38] sm:$0xf]
        %v1552 = vld [vmem:[#allocation10 + $0x3c] sm:$0xf]
        %v1553 = vld [vmem:[#allocation10 + $0x40] sm:$0xf]
        %v1554 = vld [vmem:[#allocation10 + $0x44] sm:$0xf]
        %v1555 = vld [vmem:[#allocation10 + $0x48] sm:$0xf]
        %v1556 = vld [vmem:[#allocation10 + $0x4c] sm:$0xf]
        %v1557 = vld [vmem:[#allocation10 + $0x50] sm:$0xf]
        %v1558 = vld [vmem:[#allocation10 + $0x54] sm:$0xf]
        %v1559 = vld [vmem:[#allocation10 + $0x58] sm:$0xf]
        %v1560 = vld [vmem:[#allocation10 + $0x5c] sm:$0xf]
        %v1561 = vld [vmem:[#allocation10 + $0x60] sm:$0xf]
        %v1562 = vld [vmem:[#allocation10 + $0x64] sm:$0xf]
        %v1563 = vld [vmem:[#allocation10 + $0x68] sm:$0xf]
        %v1564 = vld [vmem:[#allocation10 + $0x6c] sm:$0xf]
        %v1565 = vld [vmem:[#allocation10 + $0x70] sm:$0xf]
        %v1566 = vld [vmem:[#allocation10 + $0x74] sm:$0xf]
        %v1567 = vld [vmem:[#allocation10 + $0x78] sm:$0xf]
        %v1568 = vld [vmem:[#allocation10 + $0x7c] sm:$0xf]
        %v1569 = vld [vmem:[#allocation10 + $0x80] sm:$0xf]
        %v1570 = vld [vmem:[#allocation10 + $0x84] sm:$0xf]
        %v1571 = vld [vmem:[#allocation10 + $0x88] sm:$0xf]
        %v1572 = vld [vmem:[#allocation10 + $0x8c] sm:$0xf]
        %v1573 = vld [vmem:[#allocation10 + $0x90] sm:$0xf]
        %v1574 = vld [vmem:[#allocation10 + $0x94] sm:$0xf]
        %v1575 = vld [vmem:[#allocation10 + $0x98] sm:$0xf]
        %v1576 = vld [vmem:[#allocation10 + $0x9c] sm:$0xf]
        %v1577 = vld [vmem:[#allocation10 + $0xa0] sm:$0xf]
        %v1578 = vld [vmem:[#allocation10 + $0xa4] sm:$0xf]
        %v1579 = vld [vmem:[#allocation10 + $0xa8] sm:$0xf]
        %v1580 = vld [vmem:[#allocation10 + $0xac] sm:$0xf]
        %v1581 = vld [vmem:[#allocation10 + $0xb0] sm:$0xf]
        %v1582 = vld [vmem:[#allocation10 + $0xb4] sm:$0xf]
        %v1583 = vld [vmem:[#allocation10 + $0xb8] sm:$0xf]
        %v1584 = vld [vmem:[#allocation10 + $0xbc] sm:$0xf]
        %v1585 = vld [vmem:[#allocation10 + $0xc0] sm:$0xf]
        %v1586 = vld [vmem:[#allocation10 + $0xc4] sm:$0xf]
        %v1587 = vld [vmem:[#allocation10 + $0xc8] sm:$0xf]
        %v1588 = vld [vmem:[#allocation10 + $0xcc] sm:$0xf]
        %v1589 = vld [vmem:[#allocation10 + $0xd0] sm:$0xf]
        %v1590 = vld [vmem:[#allocation10 + $0xd4] sm:$0xf]
        %v1591 = vld [vmem:[#allocation10 + $0xd8] sm:$0xf]
        %v1592 = vld [vmem:[#allocation10 + $0xdc] sm:$0xf]
        %v1593 = vld [vmem:[#allocation10 + $0xe0] sm:$0xf]
        %v1594 = vld [vmem:[#allocation10 + $0xe4] sm:$0xf]
        %v1595 = vld [vmem:[#allocation10 + $0xe8] sm:$0xf]
        %v1596 = vld [vmem:[#allocation10 + $0xec] sm:$0xf]
        %v1597 = vld [vmem:[#allocation10 + $0xf0] sm:$0xf]
        %v1598 = vld [vmem:[#allocation10 + $0xf4] sm:$0xf]
        %v1599 = vld [vmem:[#allocation10 + $0xf8] sm:$0xf]
        %v1600 = vld [vmem:[#allocation10 + $0xfc] sm:$0xf]
        %v1601 = vld [vmem:[#allocation10 + $0x100] sm:$0xf]
        %v1602 = vld [vmem:[#allocation10 + $0x104] sm:$0xf]
        %v1603 = vld [vmem:[#allocation10 + $0x108] sm:$0xf]
        %v1604 = vld [vmem:[#allocation10 + $0x10c] sm:$0xf]
        %v1605 = vld [vmem:[#allocation10 + $0x110] sm:$0xf]
        %v1606 = vld [vmem:[#allocation10 + $0x114] sm:$0xf]
        %v1607 = vld [vmem:[#allocation10 + $0x118] sm:$0xf]
        %v1608 = vld [vmem:[#allocation10 + $0x11c] sm:$0xf]
        %v1609 = vld [vmem:[#allocation10 + $0x120] sm:$0xf]
        %v1610 = vld [vmem:[#allocation10 + $0x124] sm:$0xf]
        %v1611 = vld [vmem:[#allocation10 + $0x128] sm:$0xf]
        %v1612 = vld [vmem:[#allocation10 + $0x12c] sm:$0xf]
        %v1613 = vld [vmem:[#allocation10 + $0x130] sm:$0xf]
        %v1614 = vld [vmem:[#allocation10 + $0x134] sm:$0xf]
        %v1615 = vld [vmem:[#allocation10 + $0x138] sm:$0xf]
        %v1616 = vld [vmem:[#allocation10 + $0x13c] sm:$0xf]
        %v1617 = vld [vmem:[#allocation10 + $0x140] sm:$0xf]
        %v1618 = vld [vmem:[#allocation10 + $0x144] sm:$0xf]
        %v1619 = vld [vmem:[#allocation10 + $0x148] sm:$0xf]
        %v1620 = vld [vmem:[#allocation10 + $0x14c] sm:$0xf]
        %v1621 = vld [vmem:[#allocation10 + $0x150] sm:$0xf]
        %v1622 = vld [vmem:[#allocation10 + $0x154] sm:$0xf]
        %v1623 = vld [vmem:[#allocation10 + $0x158] sm:$0xf]
        %v1624 = vld [vmem:[#allocation10 + $0x15c] sm:$0xf]
        %v1625 = vld [vmem:[#allocation10 + $0x160] sm:$0xf]
        %v1626 = vld [vmem:[#allocation10 + $0x164] sm:$0xf]
        %v1627 = vld [vmem:[#allocation10 + $0x168] sm:$0xf]
        %v1628 = vld [vmem:[#allocation10 + $0x16c] sm:$0xf]
        %v1629 = vld [vmem:[#allocation10 + $0x170] sm:$0xf]
        %v1630 = vld [vmem:[#allocation10 + $0x174] sm:$0xf]
        %v1631 = vld [vmem:[#allocation10 + $0x178] sm:$0xf]
        %v1632 = vld [vmem:[#allocation10 + $0x17c] sm:$0xf]
        %v1633 = vld [vmem:[#allocation10 + $0x180] sm:$0xf]
        %v1634 = vld [vmem:[#allocation10 + $0x184] sm:$0xf]
        %v1635 = vld [vmem:[#allocation10 + $0x188] sm:$0xf]
        %v1636 = vld [vmem:[#allocation10 + $0x18c] sm:$0xf]
        %v1637 = vld [vmem:[#allocation10 + $0x190] sm:$0xf]
        %v1638 = vld [vmem:[#allocation10 + $0x194] sm:$0xf]
        %v1639 = vld [vmem:[#allocation10 + $0x198] sm:$0xf]
        %v1640 = vld [vmem:[#allocation10 + $0x19c] sm:$0xf]
        %v1641 = vld [vmem:[#allocation10 + $0x1a0] sm:$0xf]
        %v1642 = vld [vmem:[#allocation10 + $0x1a4] sm:$0xf]
        %v1643 = vld [vmem:[#allocation10 + $0x1a8] sm:$0xf]
        %v1644 = vld [vmem:[#allocation10 + $0x1ac] sm:$0xf]
        %v1645 = vld [vmem:[#allocation10 + $0x1b0] sm:$0xf]
        %v1646 = vld [vmem:[#allocation10 + $0x1b4] sm:$0xf]
        %v1647 = vld [vmem:[#allocation10 + $0x1b8] sm:$0xf]
        %v1648 = vld [vmem:[#allocation10 + $0x1bc] sm:$0xf]
        %v1649 = vld [vmem:[#allocation10 + $0x1c0] sm:$0xf]
        %v1650 = vld [vmem:[#allocation10 + $0x1c4] sm:$0xf]
        %v1651 = vld [vmem:[#allocation10 + $0x1c8] sm:$0xf]
        %v1652 = vld [vmem:[#allocation10 + $0x1cc] sm:$0xf]
        %v1653 = vld [vmem:[#allocation10 + $0x1d0] sm:$0xf]
        %v1654 = vld [vmem:[#allocation10 + $0x1d4] sm:$0xf]
        %v1655 = vld [vmem:[#allocation10 + $0x1d8] sm:$0xf]
        %v1656 = vld [vmem:[#allocation10 + $0x1dc] sm:$0xf]
        %v1657 = vld [vmem:[#allocation10 + $0x1e0] sm:$0xf]
        %v1658 = vld [vmem:[#allocation10 + $0x1e4] sm:$0xf]
        %v1659 = vld [vmem:[#allocation10 + $0x1e8] sm:$0xf]
        %v1660 = vld [vmem:[#allocation10 + $0x1ec] sm:$0xf]
        %v1661 = vld [vmem:[#allocation10 + $0x1f0] sm:$0xf]
        %v1662 = vld [vmem:[#allocation10 + $0x1f4] sm:$0xf]
        %v1663 = vld [vmem:[#allocation10 + $0x1f8] sm:$0xf]
        %v1664 = vld [vmem:[#allocation10 + $0x1fc] sm:$0xf]
        %v1665 = vld [vmem:[#allocation10 + $0x200] sm:$0xf]
        %v1666 = vld [vmem:[#allocation10 + $0x204] sm:$0xf]
        %v1667 = vld [vmem:[#allocation10 + $0x208] sm:$0xf]
        %v1668 = vld [vmem:[#allocation10 + $0x20c] sm:$0xf]
        %v1669 = vld [vmem:[#allocation10 + $0x210] sm:$0xf]
        %v1670 = vld [vmem:[#allocation10 + $0x214] sm:$0xf]
        %v1671 = vld [vmem:[#allocation10 + $0x218] sm:$0xf]
        %v1672 = vld [vmem:[#allocation10 + $0x21c] sm:$0xf]
        %v1673 = vld [vmem:[#allocation10 + $0x220] sm:$0xf]
        %v1674 = vld [vmem:[#allocation10 + $0x224] sm:$0xf]
        %v1675 = vld [vmem:[#allocation10 + $0x228] sm:$0xf]
        %v1676 = vld [vmem:[#allocation10 + $0x22c] sm:$0xf]
        %v1677 = vld [vmem:[#allocation10 + $0x230] sm:$0xf]
        %v1678 = vld [vmem:[#allocation10 + $0x234] sm:$0xf]
        %v1679 = vld [vmem:[#allocation10 + $0x238] sm:$0xf]
        %v1680 = vld [vmem:[#allocation10 + $0x23c] sm:$0xf]
        %v1681 = vld [vmem:[#allocation10 + $0x240] sm:$0xf]
        %v1682 = vld [vmem:[#allocation10 + $0x244] sm:$0xf]
        %v1683 = vld [vmem:[#allocation10 + $0x248] sm:$0xf]
        %v1684 = vld [vmem:[#allocation10 + $0x24c] sm:$0xf]
        %v1685 = vld [vmem:[#allocation10 + $0x250] sm:$0xf]
        %v1686 = vld [vmem:[#allocation10 + $0x254] sm:$0xf]
        %v1687 = vld [vmem:[#allocation10 + $0x258] sm:$0xf]
        %v1688 = vld [vmem:[#allocation10 + $0x25c] sm:$0xf]
        %v1689 = vld [vmem:[#allocation10 + $0x260] sm:$0xf]
        %v1690 = vld [vmem:[#allocation10 + $0x264] sm:$0xf]
        %v1691 = vld [vmem:[#allocation10 + $0x268] sm:$0xf]
        %v1692 = vld [vmem:[#allocation10 + $0x26c] sm:$0xf]
        %v1693 = vld [vmem:[#allocation10 + $0x270] sm:$0xf]
        %v1694 = vld [vmem:[#allocation10 + $0x274] sm:$0xf]
        %v1695 = vld [vmem:[#allocation10 + $0x278] sm:$0xf]
        %v1696 = vld [vmem:[#allocation10 + $0x27c] sm:$0xf]
        %v1697 = vld [vmem:[#allocation10 + $0x280] sm:$0xf]
        %v1698 = vld [vmem:[#allocation10 + $0x284] sm:$0xf]
        %v1699 = vld [vmem:[#allocation10 + $0x288] sm:$0xf]
        %v1700 = vld [vmem:[#allocation10 + $0x28c] sm:$0xf]
        %v1701 = vld [vmem:[#allocation10 + $0x290] sm:$0xf]
        %v1702 = vld [vmem:[#allocation10 + $0x294] sm:$0xf]
        %v1703 = vld [vmem:[#allocation10 + $0x298] sm:$0xf]
        %v1704 = vld [vmem:[#allocation10 + $0x29c] sm:$0xf]
        %v1705 = vld [vmem:[#allocation10 + $0x2a0] sm:$0xf]
        %v1706 = vld [vmem:[#allocation10 + $0x2a4] sm:$0xf]
        %v1707 = vld [vmem:[#allocation10 + $0x2a8] sm:$0xf]
        %v1708 = vld [vmem:[#allocation10 + $0x2ac] sm:$0xf]
        %v1709 = vld [vmem:[#allocation10 + $0x2b0] sm:$0xf]
        %v1710 = vld [vmem:[#allocation10 + $0x2b4] sm:$0xf]
        %v1711 = vld [vmem:[#allocation10 + $0x2b8] sm:$0xf]
        %v1712 = vld [vmem:[#allocation10 + $0x2bc] sm:$0xf]
        %v1713 = vld [vmem:[#allocation10 + $0x2c0] sm:$0xf]
        %v1714 = vld [vmem:[#allocation10 + $0x2c4] sm:$0xf]
        %v1715 = vld [vmem:[#allocation10 + $0x2c8] sm:$0xf]
        %v1716 = vld [vmem:[#allocation10 + $0x2cc] sm:$0xf]
        %v1717 = vld [vmem:[#allocation10 + $0x2d0] sm:$0xf]
        %v1718 = vld [vmem:[#allocation10 + $0x2d4] sm:$0xf]
        %v1719 = vld [vmem:[#allocation10 + $0x2d8] sm:$0xf]
        %v1720 = vld [vmem:[#allocation10 + $0x2dc] sm:$0xf]
        %v1721 = vld [vmem:[#allocation10 + $0x2e0] sm:$0xf]
        %v1722 = vld [vmem:[#allocation10 + $0x2e4] sm:$0xf]
        %v1723 = vld [vmem:[#allocation10 + $0x2e8] sm:$0xf]
        %v1724 = vld [vmem:[#allocation10 + $0x2ec] sm:$0xf]
        %v1725 = vld [vmem:[#allocation10 + $0x2f0] sm:$0xf]
        %v1726 = vld [vmem:[#allocation10 + $0x2f4] sm:$0xf]
        %v1727 = vld [vmem:[#allocation10 + $0x2f8] sm:$0xf]
        %v1728 = vld [vmem:[#allocation10 + $0x2fc] sm:$0xf]
        %v1729 = vld [vmem:[#allocation10 + $0x300] sm:$0xf]
        %v1730 = vld [vmem:[#allocation10 + $0x304] sm:$0xf]
        %v1731 = vld [vmem:[#allocation10 + $0x308] sm:$0xf]
        %v1732 = vld [vmem:[#allocation10 + $0x30c] sm:$0xf]
        %v1733 = vld [vmem:[#allocation10 + $0x310] sm:$0xf]
        %v1734 = vld [vmem:[#allocation10 + $0x314] sm:$0xf]
        %v1735 = vld [vmem:[#allocation10 + $0x318] sm:$0xf]
        %v1736 = vld [vmem:[#allocation10 + $0x31c] sm:$0xf]
        %v1737 = vld [vmem:[#allocation10 + $0x320] sm:$0xf]
        %v1738 = vld [vmem:[#allocation10 + $0x324] sm:$0xf]
        %v1739 = vld [vmem:[#allocation10 + $0x328] sm:$0xf]
        %v1740 = vld [vmem:[#allocation10 + $0x32c] sm:$0xf]
        %v1741 = vld [vmem:[#allocation10 + $0x330] sm:$0xf]
        %v1742 = vld [vmem:[#allocation10 + $0x334] sm:$0xf]
        %v1743 = vld [vmem:[#allocation10 + $0x338] sm:$0xf]
        %v1744 = vld [vmem:[#allocation10 + $0x33c] sm:$0xf]
        %v1745 = vld [vmem:[#allocation10 + $0x340] sm:$0xf]
        %v1746 = vld [vmem:[#allocation10 + $0x344] sm:$0xf]
        %v1747 = vld [vmem:[#allocation10 + $0x348] sm:$0xf]
        %v1748 = vld [vmem:[#allocation10 + $0x34c] sm:$0xf]
        %v1749 = vld [vmem:[#allocation10 + $0x350] sm:$0xf]
        %v1750 = vld [vmem:[#allocation10 + $0x354] sm:$0xf]
        %v1751 = vld [vmem:[#allocation10 + $0x358] sm:$0xf]
        %v1752 = vld [vmem:[#allocation10 + $0x35c] sm:$0xf]
        %v1753 = vld [vmem:[#allocation10 + $0x360] sm:$0xf]
        %v1754 = vld [vmem:[#allocation10 + $0x364] sm:$0xf]
        %v1755 = vld [vmem:[#allocation10 + $0x368] sm:$0xf]
        %v1756 = vld [vmem:[#allocation10 + $0x36c] sm:$0xf]
        %v1757 = vld [vmem:[#allocation10 + $0x370] sm:$0xf]
        %v1758 = vld [vmem:[#allocation10 + $0x374] sm:$0xf]
        %v1759 = vld [vmem:[#allocation10 + $0x378] sm:$0xf]
        %v1760 = vld [vmem:[#allocation10 + $0x37c] sm:$0xf]
        %v1761 = vld [vmem:[#allocation10 + $0x380] sm:$0xf]
        %v1762 = vld [vmem:[#allocation10 + $0x384] sm:$0xf]
        %v1763 = vld [vmem:[#allocation10 + $0x388] sm:$0xf]
        %v1764 = vld [vmem:[#allocation10 + $0x38c] sm:$0xf]
        %v1765 = vld [vmem:[#allocation10 + $0x390] sm:$0xf]
        %v1766 = vld [vmem:[#allocation10 + $0x394] sm:$0xf]
        %v1767 = vld [vmem:[#allocation10 + $0x398] sm:$0xf]
        %v1768 = vld [vmem:[#allocation10 + $0x39c] sm:$0xf]
        %v1769 = vld [vmem:[#allocation10 + $0x3a0] sm:$0xf]
        %v1770 = vld [vmem:[#allocation10 + $0x3a4] sm:$0xf]
        %v1771 = vld [vmem:[#allocation10 + $0x3a8] sm:$0xf]
        %v1772 = vld [vmem:[#allocation10 + $0x3ac] sm:$0xf]
        %v1773 = vld [vmem:[#allocation10 + $0x3b0] sm:$0xf]
        %v1774 = vld [vmem:[#allocation10 + $0x3b4] sm:$0xf]
        %v1775 = vld [vmem:[#allocation10 + $0x3b8] sm:$0xf]
        %v1776 = vld [vmem:[#allocation10 + $0x3bc] sm:$0xf]
        %v1777 = vld [vmem:[#allocation10 + $0x3c0] sm:$0xf]
        %v1778 = vld [vmem:[#allocation10 + $0x3c4] sm:$0xf]
        %v1779 = vld [vmem:[#allocation10 + $0x3c8] sm:$0xf]
        %v1780 = vld [vmem:[#allocation10 + $0x3cc] sm:$0xf]
        %v1781 = vld [vmem:[#allocation10 + $0x3d0] sm:$0xf]
        %v1782 = vld [vmem:[#allocation10 + $0x3d4] sm:$0xf]
        %v1783 = vld [vmem:[#allocation10 + $0x3d8] sm:$0xf]
        %v1784 = vld [vmem:[#allocation10 + $0x3dc] sm:$0xf]
        %v1785 = vld [vmem:[#allocation10 + $0x3e0] sm:$0xf]
        %v1786 = vld [vmem:[#allocation10 + $0x3e4] sm:$0xf]
        %v1787 = vld [vmem:[#allocation10 + $0x3e8] sm:$0xf]
        %v1788 = vld [vmem:[#allocation10 + $0x3ec] sm:$0xf]
        %v1789 = vld [vmem:[#allocation10 + $0x3f0] sm:$0xf]
        %v1790 = vld [vmem:[#allocation10 + $0x3f4] sm:$0xf]
        %v1791 = vld [vmem:[#allocation10 + $0x3f8] sm:$0xf]
        %v1792 = vld [vmem:[#allocation10 + $0x3fc] sm:$0xf]
        %v1793 = vld [vmem:[%s5] sm:$0x1]
        %v1795 = vlaneseq
        %v1796 = vshrl.u32 %v1795, 7
        %v1797 = vsub.s32 0, %v1796
        %v1798 = vrot.slane %v1793, %v1797
        %v2056 = vunpack.c.l.b16 %v1537
        %v2057 = vunpack.c.l.b16 %v1538
        %v2058 = vunpack.c.l.b16 %v1539
        %v2059 = vunpack.c.l.b16 %v1540
        %v2060 = vunpack.c.l.b16 %v1541
        %v2061 = vunpack.c.l.b16 %v1542
        %v2062 = vunpack.c.l.b16 %v1543
        %v2063 = vunpack.c.l.b16 %v1544
        %v2064 = vunpack.c.l.b16 %v1545
        %v2065 = vunpack.c.l.b16 %v1546
        %v2066 = vunpack.c.l.b16 %v1547
        %v2067 = vunpack.c.l.b16 %v1548
        %v2068 = vunpack.c.l.b16 %v1549
        %v2069 = vunpack.c.l.b16 %v1550
        %v2070 = vunpack.c.l.b16 %v1551
        %v2071 = vunpack.c.l.b16 %v1552
        %v2072 = vunpack.c.l.b16 %v1553
        %v2073 = vunpack.c.l.b16 %v1554
        %v2074 = vunpack.c.l.b16 %v1555
        %v2075 = vunpack.c.l.b16 %v1556
        %v2076 = vunpack.c.l.b16 %v1557
        %v2077 = vunpack.c.l.b16 %v1558
        %v2078 = vunpack.c.l.b16 %v1559
        %v2079 = vunpack.c.l.b16 %v1560
        %v2080 = vunpack.c.l.b16 %v1561
        %v2081 = vunpack.c.l.b16 %v1562
        %v2082 = vunpack.c.l.b16 %v1563
        %v2083 = vunpack.c.l.b16 %v1564
        %v2084 = vunpack.c.l.b16 %v1565
        %v2085 = vunpack.c.l.b16 %v1566
        %v2086 = vunpack.c.l.b16 %v1567
        %v2087 = vunpack.c.l.b16 %v1568
        %v2088 = vunpack.c.l.b16 %v1569
        %v2089 = vunpack.c.l.b16 %v1570
        %v2090 = vunpack.c.l.b16 %v1571
        %v2091 = vunpack.c.l.b16 %v1572
        %v2092 = vunpack.c.l.b16 %v1573
        %v2093 = vunpack.c.l.b16 %v1574
        %v2094 = vunpack.c.l.b16 %v1575
        %v2095 = vunpack.c.l.b16 %v1576
        %v2096 = vunpack.c.l.b16 %v1577
        %v2097 = vunpack.c.l.b16 %v1578
        %v2098 = vunpack.c.l.b16 %v1579
        %v2099 = vunpack.c.l.b16 %v1580
        %v2100 = vunpack.c.l.b16 %v1581
        %v2101 = vunpack.c.l.b16 %v1582
        %v2102 = vunpack.c.l.b16 %v1583
        %v2103 = vunpack.c.l.b16 %v1584
        %v2104 = vunpack.c.l.b16 %v1585
        %v2105 = vunpack.c.l.b16 %v1586
        %v2106 = vunpack.c.l.b16 %v1587
        %v2107 = vunpack.c.l.b16 %v1588
        %v2108 = vunpack.c.l.b16 %v1589
        %v2109 = vunpack.c.l.b16 %v1590
        %v2110 = vunpack.c.l.b16 %v1591
        %v2111 = vunpack.c.l.b16 %v1592
        %v2112 = vunpack.c.l.b16 %v1593
        %v2113 = vunpack.c.l.b16 %v1594
        %v2114 = vunpack.c.l.b16 %v1595
        %v2115 = vunpack.c.l.b16 %v1596
        %v2116 = vunpack.c.l.b16 %v1597
        %v2117 = vunpack.c.l.b16 %v1598
        %v2118 = vunpack.c.l.b16 %v1599
        %v2119 = vunpack.c.l.b16 %v1600
        %v2120 = vunpack.c.l.b16 %v1601
        %v2121 = vunpack.c.l.b16 %v1602
        %v2122 = vunpack.c.l.b16 %v1603
        %v2123 = vunpack.c.l.b16 %v1604
        %v2124 = vunpack.c.l.b16 %v1605
        %v2125 = vunpack.c.l.b16 %v1606
        %v2126 = vunpack.c.l.b16 %v1607
        %v2127 = vunpack.c.l.b16 %v1608
        %v2128 = vunpack.c.l.b16 %v1609
        %v2129 = vunpack.c.l.b16 %v1610
        %v2130 = vunpack.c.l.b16 %v1611
        %v2131 = vunpack.c.l.b16 %v1612
        %v2132 = vunpack.c.l.b16 %v1613
        %v2133 = vunpack.c.l.b16 %v1614
        %v2134 = vunpack.c.l.b16 %v1615
        %v2135 = vunpack.c.l.b16 %v1616
        %v2136 = vunpack.c.l.b16 %v1617
        %v2137 = vunpack.c.l.b16 %v1618
        %v2138 = vunpack.c.l.b16 %v1619
        %v2139 = vunpack.c.l.b16 %v1620
        %v2140 = vunpack.c.l.b16 %v1621
        %v2141 = vunpack.c.l.b16 %v1622
        %v2142 = vunpack.c.l.b16 %v1623
        %v2143 = vunpack.c.l.b16 %v1624
        %v2144 = vunpack.c.l.b16 %v1625
        %v2145 = vunpack.c.l.b16 %v1626
        %v2146 = vunpack.c.l.b16 %v1627
        %v2147 = vunpack.c.l.b16 %v1628
        %v2148 = vunpack.c.l.b16 %v1629
        %v2149 = vunpack.c.l.b16 %v1630
        %v2150 = vunpack.c.l.b16 %v1631
        %v2151 = vunpack.c.l.b16 %v1632
        %v2152 = vunpack.c.l.b16 %v1633
        %v2153 = vunpack.c.l.b16 %v1634
        %v2154 = vunpack.c.l.b16 %v1635
        %v2155 = vunpack.c.l.b16 %v1636
        %v2156 = vunpack.c.l.b16 %v1637
        %v2157 = vunpack.c.l.b16 %v1638
        %v2158 = vunpack.c.l.b16 %v1639
        %v2159 = vunpack.c.l.b16 %v1640
        %v2160 = vunpack.c.l.b16 %v1641
        %v2161 = vunpack.c.l.b16 %v1642
        %v2162 = vunpack.c.l.b16 %v1643
        %v2163 = vunpack.c.l.b16 %v1644
        %v2164 = vunpack.c.l.b16 %v1645
        %v2165 = vunpack.c.l.b16 %v1646
        %v2166 = vunpack.c.l.b16 %v1647
        %v2167 = vunpack.c.l.b16 %v1648
        %v2168 = vunpack.c.l.b16 %v1649
        %v2169 = vunpack.c.l.b16 %v1650
        %v2170 = vunpack.c.l.b16 %v1651
        %v2171 = vunpack.c.l.b16 %v1652
        %v2172 = vunpack.c.l.b16 %v1653
        %v2173 = vunpack.c.l.b16 %v1654
        %v2174 = vunpack.c.l.b16 %v1655
        %v2175 = vunpack.c.l.b16 %v1656
        %v2176 = vunpack.c.l.b16 %v1657
        %v2177 = vunpack.c.l.b16 %v1658
        %v2178 = vunpack.c.l.b16 %v1659
        %v2179 = vunpack.c.l.b16 %v1660
        %v2180 = vunpack.c.l.b16 %v1661
        %v2181 = vunpack.c.l.b16 %v1662
        %v2182 = vunpack.c.l.b16 %v1663
        %v2183 = vunpack.c.l.b16 %v1664
        %v2184 = vunpack.c.l.b16 %v1665
        %v2185 = vunpack.c.l.b16 %v1666
        %v2186 = vunpack.c.l.b16 %v1667
        %v2187 = vunpack.c.l.b16 %v1668
        %v2188 = vunpack.c.l.b16 %v1669
        %v2189 = vunpack.c.l.b16 %v1670
        %v2190 = vunpack.c.l.b16 %v1671
        %v2191 = vunpack.c.l.b16 %v1672
        %v2192 = vunpack.c.l.b16 %v1673
        %v2193 = vunpack.c.l.b16 %v1674
        %v2194 = vunpack.c.l.b16 %v1675
        %v2195 = vunpack.c.l.b16 %v1676
        %v2196 = vunpack.c.l.b16 %v1677
        %v2197 = vunpack.c.l.b16 %v1678
        %v2198 = vunpack.c.l.b16 %v1679
        %v2199 = vunpack.c.l.b16 %v1680
        %v2200 = vunpack.c.l.b16 %v1681
        %v2201 = vunpack.c.l.b16 %v1682
        %v2202 = vunpack.c.l.b16 %v1683
        %v2203 = vunpack.c.l.b16 %v1684
        %v2204 = vunpack.c.l.b16 %v1685
        %v2205 = vunpack.c.l.b16 %v1686
        %v2206 = vunpack.c.l.b16 %v1687
        %v2207 = vunpack.c.l.b16 %v1688
        %v2208 = vunpack.c.l.b16 %v1689
        %v2209 = vunpack.c.l.b16 %v1690
        %v2210 = vunpack.c.l.b16 %v1691
        %v2211 = vunpack.c.l.b16 %v1692
        %v2212 = vunpack.c.l.b16 %v1693
        %v2213 = vunpack.c.l.b16 %v1694
        %v2214 = vunpack.c.l.b16 %v1695
        %v2215 = vunpack.c.l.b16 %v1696
        %v2216 = vunpack.c.l.b16 %v1697
        %v2217 = vunpack.c.l.b16 %v1698
        %v2218 = vunpack.c.l.b16 %v1699
        %v2219 = vunpack.c.l.b16 %v1700
        %v2220 = vunpack.c.l.b16 %v1701
        %v2221 = vunpack.c.l.b16 %v1702
        %v2222 = vunpack.c.l.b16 %v1703
        %v2223 = vunpack.c.l.b16 %v1704
        %v2224 = vunpack.c.l.b16 %v1705
        %v2225 = vunpack.c.l.b16 %v1706
        %v2226 = vunpack.c.l.b16 %v1707
        %v2227 = vunpack.c.l.b16 %v1708
        %v2228 = vunpack.c.l.b16 %v1709
        %v2229 = vunpack.c.l.b16 %v1710
        %v2230 = vunpack.c.l.b16 %v1711
        %v2231 = vunpack.c.l.b16 %v1712
        %v2232 = vunpack.c.l.b16 %v1713
        %v2233 = vunpack.c.l.b16 %v1714
        %v2234 = vunpack.c.l.b16 %v1715
        %v2235 = vunpack.c.l.b16 %v1716
        %v2236 = vunpack.c.l.b16 %v1717
        %v2237 = vunpack.c.l.b16 %v1718
        %v2238 = vunpack.c.l.b16 %v1719
        %v2239 = vunpack.c.l.b16 %v1720
        %v2240 = vunpack.c.l.b16 %v1721
        %v2241 = vunpack.c.l.b16 %v1722
        %v2242 = vunpack.c.l.b16 %v1723
        %v2243 = vunpack.c.l.b16 %v1724
        %v2244 = vunpack.c.l.b16 %v1725
        %v2245 = vunpack.c.l.b16 %v1726
        %v2246 = vunpack.c.l.b16 %v1727
        %v2247 = vunpack.c.l.b16 %v1728
        %v2248 = vunpack.c.l.b16 %v1729
        %v2249 = vunpack.c.l.b16 %v1730
        %v2250 = vunpack.c.l.b16 %v1731
        %v2251 = vunpack.c.l.b16 %v1732
        %v2252 = vunpack.c.l.b16 %v1733
        %v2253 = vunpack.c.l.b16 %v1734
        %v2254 = vunpack.c.l.b16 %v1735
        %v2255 = vunpack.c.l.b16 %v1736
        %v2256 = vunpack.c.l.b16 %v1737
        %v2257 = vunpack.c.l.b16 %v1738
        %v2258 = vunpack.c.l.b16 %v1739
        %v2259 = vunpack.c.l.b16 %v1740
        %v2260 = vunpack.c.l.b16 %v1741
        %v2261 = vunpack.c.l.b16 %v1742
        %v2262 = vunpack.c.l.b16 %v1743
        %v2263 = vunpack.c.l.b16 %v1744
        %v2264 = vunpack.c.l.b16 %v1745
        %v2265 = vunpack.c.l.b16 %v1746
        %v2266 = vunpack.c.l.b16 %v1747
        %v2267 = vunpack.c.l.b16 %v1748
        %v2268 = vunpack.c.l.b16 %v1749
        %v2269 = vunpack.c.l.b16 %v1750
        %v2270 = vunpack.c.l.b16 %v1751
        %v2271 = vunpack.c.l.b16 %v1752
        %v2272 = vunpack.c.l.b16 %v1753
        %v2273 = vunpack.c.l.b16 %v1754
        %v2274 = vunpack.c.l.b16 %v1755
        %v2275 = vunpack.c.l.b16 %v1756
        %v2276 = vunpack.c.l.b16 %v1757
        %v2277 = vunpack.c.l.b16 %v1758
        %v2278 = vunpack.c.l.b16 %v1759
        %v2279 = vunpack.c.l.b16 %v1760
        %v2280 = vunpack.c.l.b16 %v1761
        %v2281 = vunpack.c.l.b16 %v1762
        %v2282 = vunpack.c.l.b16 %v1763
        %v2283 = vunpack.c.l.b16 %v1764
        %v2284 = vunpack.c.l.b16 %v1765
        %v2285 = vunpack.c.l.b16 %v1766
        %v2286 = vunpack.c.l.b16 %v1767
        %v2287 = vunpack.c.l.b16 %v1768
        %v2288 = vunpack.c.l.b16 %v1769
        %v2289 = vunpack.c.l.b16 %v1770
        %v2290 = vunpack.c.l.b16 %v1771
        %v2291 = vunpack.c.l.b16 %v1772
        %v2292 = vunpack.c.l.b16 %v1773
        %v2293 = vunpack.c.l.b16 %v1774
        %v2294 = vunpack.c.l.b16 %v1775
        %v2295 = vunpack.c.l.b16 %v1776
        %v2296 = vunpack.c.l.b16 %v1777
        %v2297 = vunpack.c.l.b16 %v1778
        %v2298 = vunpack.c.l.b16 %v1779
        %v2299 = vunpack.c.l.b16 %v1780
        %v2300 = vunpack.c.l.b16 %v1781
        %v2301 = vunpack.c.l.b16 %v1782
        %v2302 = vunpack.c.l.b16 %v1783
        %v2303 = vunpack.c.l.b16 %v1784
        %v2304 = vunpack.c.l.b16 %v1785
        %v2305 = vunpack.c.l.b16 %v1786
        %v2306 = vunpack.c.l.b16 %v1787
        %v2307 = vunpack.c.l.b16 %v1788
        %v2308 = vunpack.c.l.b16 %v1789
        %v2309 = vunpack.c.l.b16 %v1790
        %v2310 = vunpack.c.l.b16 %v1791
        %v2311 = vunpack.c.l.b16 %v1792
        %v2312 = vpack.c.b16 %v2057, %v2056
        %v2313 = vpack.c.b16 %v2059, %v2058
        %v2314 = vpack.c.b16 %v2061, %v2060
        %v2315 = vpack.c.b16 %v2063, %v2062
        %v2316 = vpack.c.b16 %v2065, %v2064
        %v2317 = vpack.c.b16 %v2067, %v2066
        %v2318 = vpack.c.b16 %v2069, %v2068
        %v2319 = vpack.c.b16 %v2071, %v2070
        %v2320 = vpack.c.b16 %v2073, %v2072
        %v2321 = vpack.c.b16 %v2075, %v2074
        %v2322 = vpack.c.b16 %v2077, %v2076
        %v2323 = vpack.c.b16 %v2079, %v2078
        %v2324 = vpack.c.b16 %v2081, %v2080
        %v2325 = vpack.c.b16 %v2083, %v2082
        %v2326 = vpack.c.b16 %v2085, %v2084
        %v2327 = vpack.c.b16 %v2087, %v2086
        %v2328 = vpack.c.b16 %v2089, %v2088
        %v2329 = vpack.c.b16 %v2091, %v2090
        %v2330 = vpack.c.b16 %v2093, %v2092
        %v2331 = vpack.c.b16 %v2095, %v2094
        %v2332 = vpack.c.b16 %v2097, %v2096
        %v2333 = vpack.c.b16 %v2099, %v2098
        %v2334 = vpack.c.b16 %v2101, %v2100
        %v2335 = vpack.c.b16 %v2103, %v2102
        %v2336 = vpack.c.b16 %v2105, %v2104
        %v2337 = vpack.c.b16 %v2107, %v2106
        %v2338 = vpack.c.b16 %v2109, %v2108
        %v2339 = vpack.c.b16 %v2111, %v2110
        %v2340 = vpack.c.b16 %v2113, %v2112
        %v2341 = vpack.c.b16 %v2115, %v2114
        %v2342 = vpack.c.b16 %v2117, %v2116
        %v2343 = vpack.c.b16 %v2119, %v2118
        %v2344 = vpack.c.b16 %v2121, %v2120
        %v2345 = vpack.c.b16 %v2123, %v2122
        %v2346 = vpack.c.b16 %v2125, %v2124
        %v2347 = vpack.c.b16 %v2127, %v2126
        %v2348 = vpack.c.b16 %v2129, %v2128
        %v2349 = vpack.c.b16 %v2131, %v2130
        %v2350 = vpack.c.b16 %v2133, %v2132
        %v2351 = vpack.c.b16 %v2135, %v2134
        %v2352 = vpack.c.b16 %v2137, %v2136
        %v2353 = vpack.c.b16 %v2139, %v2138
        %v2354 = vpack.c.b16 %v2141, %v2140
        %v2355 = vpack.c.b16 %v2143, %v2142
        %v2356 = vpack.c.b16 %v2145, %v2144
        %v2357 = vpack.c.b16 %v2147, %v2146
        %v2358 = vpack.c.b16 %v2149, %v2148
        %v2359 = vpack.c.b16 %v2151, %v2150
        %v2360 = vpack.c.b16 %v2153, %v2152
        %v2361 = vpack.c.b16 %v2155, %v2154
        %v2362 = vpack.c.b16 %v2157, %v2156
        %v2363 = vpack.c.b16 %v2159, %v2158
        %v2364 = vpack.c.b16 %v2161, %v2160
        %v2365 = vpack.c.b16 %v2163, %v2162
        %v2366 = vpack.c.b16 %v2165, %v2164
        %v2367 = vpack.c.b16 %v2167, %v2166
        %v2368 = vpack.c.b16 %v2169, %v2168
        %v2369 = vpack.c.b16 %v2171, %v2170
        %v2370 = vpack.c.b16 %v2173, %v2172
        %v2371 = vpack.c.b16 %v2175, %v2174
        %v2372 = vpack.c.b16 %v2177, %v2176
        %v2373 = vpack.c.b16 %v2179, %v2178
        %v2374 = vpack.c.b16 %v2181, %v2180
        %v2375 = vpack.c.b16 %v2183, %v2182
        %v2376 = vpack.c.b16 %v2185, %v2184
        %v2377 = vpack.c.b16 %v2187, %v2186
        %v2378 = vpack.c.b16 %v2189, %v2188
        %v2379 = vpack.c.b16 %v2191, %v2190
        %v2380 = vpack.c.b16 %v2193, %v2192
        %v2381 = vpack.c.b16 %v2195, %v2194
        %v2382 = vpack.c.b16 %v2197, %v2196
        %v2383 = vpack.c.b16 %v2199, %v2198
        %v2384 = vpack.c.b16 %v2201, %v2200
        %v2385 = vpack.c.b16 %v2203, %v2202
        %v2386 = vpack.c.b16 %v2205, %v2204
        %v2387 = vpack.c.b16 %v2207, %v2206
        %v2388 = vpack.c.b16 %v2209, %v2208
        %v2389 = vpack.c.b16 %v2211, %v2210
        %v2390 = vpack.c.b16 %v2213, %v2212
        %v2391 = vpack.c.b16 %v2215, %v2214
        %v2392 = vpack.c.b16 %v2217, %v2216
        %v2393 = vpack.c.b16 %v2219, %v2218
        %v2394 = vpack.c.b16 %v2221, %v2220
        %v2395 = vpack.c.b16 %v2223, %v2222
        %v2396 = vpack.c.b16 %v2225, %v2224
        %v2397 = vpack.c.b16 %v2227, %v2226
        %v2398 = vpack.c.b16 %v2229, %v2228
        %v2399 = vpack.c.b16 %v2231, %v2230
        %v2400 = vpack.c.b16 %v2233, %v2232
        %v2401 = vpack.c.b16 %v2235, %v2234
        %v2402 = vpack.c.b16 %v2237, %v2236
        %v2403 = vpack.c.b16 %v2239, %v2238
        %v2404 = vpack.c.b16 %v2241, %v2240
        %v2405 = vpack.c.b16 %v2243, %v2242
        %v2406 = vpack.c.b16 %v2245, %v2244
        %v2407 = vpack.c.b16 %v2247, %v2246
        %v2408 = vpack.c.b16 %v2249, %v2248
        %v2409 = vpack.c.b16 %v2251, %v2250
        %v2410 = vpack.c.b16 %v2253, %v2252
        %v2411 = vpack.c.b16 %v2255, %v2254
        %v2412 = vpack.c.b16 %v2257, %v2256
        %v2413 = vpack.c.b16 %v2259, %v2258
        %v2414 = vpack.c.b16 %v2261, %v2260
        %v2415 = vpack.c.b16 %v2263, %v2262
        %v2416 = vpack.c.b16 %v2265, %v2264
        %v2417 = vpack.c.b16 %v2267, %v2266
        %v2418 = vpack.c.b16 %v2269, %v2268
        %v2419 = vpack.c.b16 %v2271, %v2270
        %v2420 = vpack.c.b16 %v2273, %v2272
        %v2421 = vpack.c.b16 %v2275, %v2274
        %v2422 = vpack.c.b16 %v2277, %v2276
        %v2423 = vpack.c.b16 %v2279, %v2278
        %v2424 = vpack.c.b16 %v2281, %v2280
        %v2425 = vpack.c.b16 %v2283, %v2282
        %v2426 = vpack.c.b16 %v2285, %v2284
        %v2427 = vpack.c.b16 %v2287, %v2286
        %v2428 = vpack.c.b16 %v2289, %v2288
        %v2429 = vpack.c.b16 %v2291, %v2290
        %v2430 = vpack.c.b16 %v2293, %v2292
        %v2431 = vpack.c.b16 %v2295, %v2294
        %v2432 = vpack.c.b16 %v2297, %v2296
        %v2433 = vpack.c.b16 %v2299, %v2298
        %v2434 = vpack.c.b16 %v2301, %v2300
        %v2435 = vpack.c.b16 %v2303, %v2302
        %v2436 = vpack.c.b16 %v2305, %v2304
        %v2437 = vpack.c.b16 %v2307, %v2306
        %v2438 = vpack.c.b16 %v2309, %v2308
        %v2439 = vpack.c.b16 %v2311, %v2310
        %2568 = vmatprep.subr.bf16.mxu0 0
        %2569 = vmatpush1.bf16.msra.mxu0 %v2319
        %2570 = vmatprep.subr.bf16.mxu0 0
        %2571 = vmatpush1.bf16.msra.mxu0 %v2318
        %2572 = vmatprep.subr.bf16.mxu0 0
        %2573 = vmatpush1.bf16.msra.mxu0 %v2317
        %2574 = vmatprep.subr.bf16.mxu0 0
        %2575 = vmatpush1.bf16.msra.mxu0 %v2316
        %2576 = vmatprep.subr.bf16.mxu0 0
        %2577 = vmatpush1.bf16.msra.mxu0 %v2315
        %2578 = vmatprep.subr.bf16.mxu0 0
        %2579 = vmatpush1.bf16.msra.mxu0 %v2314
        %2580 = vmatprep.subr.bf16.mxu0 0
        %2581 = vmatpush1.bf16.msra.mxu0 %v2313
        %2582 = vmatprep.subr.bf16.mxu0 0
        %2583 = vmatpush1.bf16.msra.mxu0 %v2312
        %2584 = vmatprep.subr.bf16.mxu0 0
        %2585 = vmatpush2.bf16.msra.mxu0 %v2327
        %2586 = vmatprep.subr.bf16.mxu0 0
        %2587 = vmatpush2.bf16.msra.mxu0 %v2326
        %2588 = vmatprep.subr.bf16.mxu0 0
        %2589 = vmatpush2.bf16.msra.mxu0 %v2325
        %2590 = vmatprep.subr.bf16.mxu0 0
        %2591 = vmatpush2.bf16.msra.mxu0 %v2324
        %2592 = vmatprep.subr.bf16.mxu0 0
        %2593 = vmatpush2.bf16.msra.mxu0 %v2323
        %2594 = vmatprep.subr.bf16.mxu0 0
        %2595 = vmatpush2.bf16.msra.mxu0 %v2322
        %2596 = vmatprep.subr.bf16.mxu0 0
        %2597 = vmatpush2.bf16.msra.mxu0 %v2321
        %2598 = vmatprep.subr.bf16.mxu0 0
        %2599 = vmatpush2.bf16.msra.mxu0 %v2320
        %2600 = vmatprep.mubr.bf16.mxu0 %v1522
        %2601 = vmatmul.mubr.bf16.gmra.mxu0 %v1521
        %v2602 = vpop.f32.mrf.mxu0
        %v2603 = vadd.f32 %v1798, %v2602
        %v2604 = vpop.f32.mrf.mxu0
        %v2605 = vpop.f32.mrf.mxu0
        %v2606 = vpop.f32.mrf.mxu0
        %2607 = vdwg.mxu0
        %2608 = vmatprep.subr.bf16.mxu0 0
        %2609 = vmatpush1.bf16.msra.mxu0 %v2335
        %2610 = vmatprep.subr.bf16.mxu0 0
        %2611 = vmatpush1.bf16.msra.mxu0 %v2334
        %2612 = vmatprep.subr.bf16.mxu0 0
        %2613 = vmatpush1.bf16.msra.mxu0 %v2333
        %2614 = vmatprep.subr.bf16.mxu0 0
        %2615 = vmatpush1.bf16.msra.mxu0 %v2332
        %2616 = vmatprep.subr.bf16.mxu0 0
        %2617 = vmatpush1.bf16.msra.mxu0 %v2331
        %2618 = vmatprep.subr.bf16.mxu0 0
        %2619 = vmatpush1.bf16.msra.mxu0 %v2330
        %2620 = vmatprep.subr.bf16.mxu0 0
        %2621 = vmatpush1.bf16.msra.mxu0 %v2329
        %2622 = vmatprep.subr.bf16.mxu0 0
        %2623 = vmatpush1.bf16.msra.mxu0 %v2328
        %2624 = vmatprep.subr.bf16.mxu0 0
        %2625 = vmatpush2.bf16.msra.mxu0 %v2343
        %2626 = vmatprep.subr.bf16.mxu0 0
        %2627 = vmatpush2.bf16.msra.mxu0 %v2342
        %2628 = vmatprep.subr.bf16.mxu0 0
        %2629 = vmatpush2.bf16.msra.mxu0 %v2341
        %2630 = vmatprep.subr.bf16.mxu0 0
        %2631 = vmatpush2.bf16.msra.mxu0 %v2340
        %2632 = vmatprep.subr.bf16.mxu0 0
        %2633 = vmatpush2.bf16.msra.mxu0 %v2339
        %2634 = vmatprep.subr.bf16.mxu0 0
        %2635 = vmatpush2.bf16.msra.mxu0 %v2338
        %2636 = vmatprep.subr.bf16.mxu0 0
        %2637 = vmatpush2.bf16.msra.mxu0 %v2337
        %2638 = vmatprep.subr.bf16.mxu0 0
        %2639 = vmatpush2.bf16.msra.mxu0 %v2336
        %2640 = vmatprep.mubr.bf16.mxu0 %v1524
        %2641 = vmatmul.mubr.bf16.gmra.mxu0 %v1523
        %v2642 = vpop.f32.mrf.mxu0
        %v2643 = vadd.f32 %v2603, %v2642
        %v2644 = vpop.f32.mrf.mxu0
        %v2645 = vpop.f32.mrf.mxu0
        %v2646 = vpop.f32.mrf.mxu0
        %2647 = vdwg.mxu0
        %2648 = vmatprep.subr.bf16.mxu0 0
        %2649 = vmatpush1.bf16.msra.mxu0 %v2351
        %2650 = vmatprep.subr.bf16.mxu0 0
        %2651 = vmatpush1.bf16.msra.mxu0 %v2350
        %2652 = vmatprep.subr.bf16.mxu0 0
        %2653 = vmatpush1.bf16.msra.mxu0 %v2349
        %2654 = vmatprep.subr.bf16.mxu0 0
        %2655 = vmatpush1.bf16.msra.mxu0 %v2348
        %2656 = vmatprep.subr.bf16.mxu0 0
        %2657 = vmatpush1.bf16.msra.mxu0 %v2347
        %2658 = vmatprep.subr.bf16.mxu0 0
        %2659 = vmatpush1.bf16.msra.mxu0 %v2346
        %2660 = vmatprep.subr.bf16.mxu0 0
        %2661 = vmatpush1.bf16.msra.mxu0 %v2345
        %2662 = vmatprep.subr.bf16.mxu0 0
        %2663 = vmatpush1.bf16.msra.mxu0 %v2344
        %2664 = vmatprep.subr.bf16.mxu0 0
        %2665 = vmatpush2.bf16.msra.mxu0 %v2359
        %2666 = vmatprep.subr.bf16.mxu0 0
        %2667 = vmatpush2.bf16.msra.mxu0 %v2358
        %2668 = vmatprep.subr.bf16.mxu0 0
        %2669 = vmatpush2.bf16.msra.mxu0 %v2357
        %2670 = vmatprep.subr.bf16.mxu0 0
        %2671 = vmatpush2.bf16.msra.mxu0 %v2356
        %2672 = vmatprep.subr.bf16.mxu0 0
        %2673 = vmatpush2.bf16.msra.mxu0 %v2355
        %2674 = vmatprep.subr.bf16.mxu0 0
        %2675 = vmatpush2.bf16.msra.mxu0 %v2354
        %2676 = vmatprep.subr.bf16.mxu0 0
        %2677 = vmatpush2.bf16.msra.mxu0 %v2353
        %2678 = vmatprep.subr.bf16.mxu0 0
        %2679 = vmatpush2.bf16.msra.mxu0 %v2352
        %2680 = vmatprep.mubr.bf16.mxu0 %v1526
        %2681 = vmatmul.mubr.bf16.gmra.mxu0 %v1525
        %v2682 = vpop.f32.mrf.mxu0
        %v2683 = vadd.f32 %v2643, %v2682
        %v2684 = vpop.f32.mrf.mxu0
        %v2685 = vpop.f32.mrf.mxu0
        %v2686 = vpop.f32.mrf.mxu0
        %2687 = vdwg.mxu0
        %2688 = vmatprep.subr.bf16.mxu0 0
        %2689 = vmatpush1.bf16.msra.mxu0 %v2367
        %2690 = vmatprep.subr.bf16.mxu0 0
        %2691 = vmatpush1.bf16.msra.mxu0 %v2366
        %2692 = vmatprep.subr.bf16.mxu0 0
        %2693 = vmatpush1.bf16.msra.mxu0 %v2365
        %2694 = vmatprep.subr.bf16.mxu0 0
        %2695 = vmatpush1.bf16.msra.mxu0 %v2364
        %2696 = vmatprep.subr.bf16.mxu0 0
        %2697 = vmatpush1.bf16.msra.mxu0 %v2363
        %2698 = vmatprep.subr.bf16.mxu0 0
        %2699 = vmatpush1.bf16.msra.mxu0 %v2362
        %2700 = vmatprep.subr.bf16.mxu0 0
        %2701 = vmatpush1.bf16.msra.mxu0 %v2361
        %2702 = vmatprep.subr.bf16.mxu0 0
        %2703 = vmatpush1.bf16.msra.mxu0 %v2360
        %2704 = vmatprep.subr.bf16.mxu0 0
        %2705 = vmatpush2.bf16.msra.mxu0 %v2375
        %2706 = vmatprep.subr.bf16.mxu0 0
        %2707 = vmatpush2.bf16.msra.mxu0 %v2374
        %2708 = vmatprep.subr.bf16.mxu0 0
        %2709 = vmatpush2.bf16.msra.mxu0 %v2373
        %2710 = vmatprep.subr.bf16.mxu0 0
        %2711 = vmatpush2.bf16.msra.mxu0 %v2372
        %2712 = vmatprep.subr.bf16.mxu0 0
        %2713 = vmatpush2.bf16.msra.mxu0 %v2371
        %2714 = vmatprep.subr.bf16.mxu0 0
        %2715 = vmatpush2.bf16.msra.mxu0 %v2370
        %2716 = vmatprep.subr.bf16.mxu0 0
        %2717 = vmatpush2.bf16.msra.mxu0 %v2369
        %2718 = vmatprep.subr.bf16.mxu0 0
        %2719 = vmatpush2.bf16.msra.mxu0 %v2368
        %2720 = vmatprep.mubr.bf16.mxu0 %v1528
        %2721 = vmatmul.mubr.bf16.gmra.mxu0 %v1527
        %v2722 = vpop.f32.mrf.mxu0
        %v2723 = vadd.f32 %v2683, %v2722
        %v2724 = vpop.f32.mrf.mxu0
        %v2725 = vpop.f32.mrf.mxu0
        %v2726 = vpop.f32.mrf.mxu0
        %2727 = vdwg.mxu0
        %2728 = vmatprep.subr.bf16.mxu0 0
        %2729 = vmatpush1.bf16.msra.mxu0 %v2383
        %2730 = vmatprep.subr.bf16.mxu0 0
        %2731 = vmatpush1.bf16.msra.mxu0 %v2382
        %2732 = vmatprep.subr.bf16.mxu0 0
        %2733 = vmatpush1.bf16.msra.mxu0 %v2381
        %2734 = vmatprep.subr.bf16.mxu0 0
        %2735 = vmatpush1.bf16.msra.mxu0 %v2380
        %2736 = vmatprep.subr.bf16.mxu0 0
        %2737 = vmatpush1.bf16.msra.mxu0 %v2379
        %2738 = vmatprep.subr.bf16.mxu0 0
        %2739 = vmatpush1.bf16.msra.mxu0 %v2378
        %2740 = vmatprep.subr.bf16.mxu0 0
        %2741 = vmatpush1.bf16.msra.mxu0 %v2377
        %2742 = vmatprep.subr.bf16.mxu0 0
        %2743 = vmatpush1.bf16.msra.mxu0 %v2376
        %2744 = vmatprep.subr.bf16.mxu0 0
        %2745 = vmatpush2.bf16.msra.mxu0 %v2391
        %2746 = vmatprep.subr.bf16.mxu0 0
        %2747 = vmatpush2.bf16.msra.mxu0 %v2390
        %2748 = vmatprep.subr.bf16.mxu0 0
        %2749 = vmatpush2.bf16.msra.mxu0 %v2389
        %2750 = vmatprep.subr.bf16.mxu0 0
        %2751 = vmatpush2.bf16.msra.mxu0 %v2388
        %2752 = vmatprep.subr.bf16.mxu0 0
        %2753 = vmatpush2.bf16.msra.mxu0 %v2387
        %2754 = vmatprep.subr.bf16.mxu0 0
        %2755 = vmatpush2.bf16.msra.mxu0 %v2386
        %2756 = vmatprep.subr.bf16.mxu0 0
        %2757 = vmatpush2.bf16.msra.mxu0 %v2385
        %2758 = vmatprep.subr.bf16.mxu0 0
        %2759 = vmatpush2.bf16.msra.mxu0 %v2384
        %2760 = vmatprep.mubr.bf16.mxu0 %v1530
        %2761 = vmatmul.mubr.bf16.gmra.mxu0 %v1529
        %v2762 = vpop.f32.mrf.mxu0
        %v2763 = vadd.f32 %v2723, %v2762
        %v2764 = vpop.f32.mrf.mxu0
        %v2765 = vpop.f32.mrf.mxu0
        %v2766 = vpop.f32.mrf.mxu0
        %2767 = vdwg.mxu0
        %2768 = vmatprep.subr.bf16.mxu0 0
        %2769 = vmatpush1.bf16.msra.mxu0 %v2399
        %2770 = vmatprep.subr.bf16.mxu0 0
        %2771 = vmatpush1.bf16.msra.mxu0 %v2398
        %2772 = vmatprep.subr.bf16.mxu0 0
        %2773 = vmatpush1.bf16.msra.mxu0 %v2397
        %2774 = vmatprep.subr.bf16.mxu0 0
        %2775 = vmatpush1.bf16.msra.mxu0 %v2396
        %2776 = vmatprep.subr.bf16.mxu0 0
        %2777 = vmatpush1.bf16.msra.mxu0 %v2395
        %2778 = vmatprep.subr.bf16.mxu0 0
        %2779 = vmatpush1.bf16.msra.mxu0 %v2394
        %2780 = vmatprep.subr.bf16.mxu0 0
        %2781 = vmatpush1.bf16.msra.mxu0 %v2393
        %2782 = vmatprep.subr.bf16.mxu0 0
        %2783 = vmatpush1.bf16.msra.mxu0 %v2392
        %2784 = vmatprep.subr.bf16.mxu0 0
        %2785 = vmatpush2.bf16.msra.mxu0 %v2407
        %2786 = vmatprep.subr.bf16.mxu0 0
        %2787 = vmatpush2.bf16.msra.mxu0 %v2406
        %2788 = vmatprep.subr.bf16.mxu0 0
        %2789 = vmatpush2.bf16.msra.mxu0 %v2405
        %2790 = vmatprep.subr.bf16.mxu0 0
        %2791 = vmatpush2.bf16.msra.mxu0 %v2404
        %2792 = vmatprep.subr.bf16.mxu0 0
        %2793 = vmatpush2.bf16.msra.mxu0 %v2403
        %2794 = vmatprep.subr.bf16.mxu0 0
        %2795 = vmatpush2.bf16.msra.mxu0 %v2402
        %2796 = vmatprep.subr.bf16.mxu0 0
        %2797 = vmatpush2.bf16.msra.mxu0 %v2401
        %2798 = vmatprep.subr.bf16.mxu0 0
        %2799 = vmatpush2.bf16.msra.mxu0 %v2400
        %2800 = vmatprep.mubr.bf16.mxu0 %v1532
        %2801 = vmatmul.mubr.bf16.gmra.mxu0 %v1531
        %v2802 = vpop.f32.mrf.mxu0
        %v2803 = vadd.f32 %v2763, %v2802
        %v2804 = vpop.f32.mrf.mxu0
        %v2805 = vpop.f32.mrf.mxu0
        %v2806 = vpop.f32.mrf.mxu0
        %2807 = vdwg.mxu0
        %2808 = vmatprep.subr.bf16.mxu0 0
        %2809 = vmatpush1.bf16.msra.mxu0 %v2415
        %2810 = vmatprep.subr.bf16.mxu0 0
        %2811 = vmatpush1.bf16.msra.mxu0 %v2414
        %2812 = vmatprep.subr.bf16.mxu0 0
        %2813 = vmatpush1.bf16.msra.mxu0 %v2413
        %2814 = vmatprep.subr.bf16.mxu0 0
        %2815 = vmatpush1.bf16.msra.mxu0 %v2412
        %2816 = vmatprep.subr.bf16.mxu0 0
        %2817 = vmatpush1.bf16.msra.mxu0 %v2411
        %2818 = vmatprep.subr.bf16.mxu0 0
        %2819 = vmatpush1.bf16.msra.mxu0 %v2410
        %2820 = vmatprep.subr.bf16.mxu0 0
        %2821 = vmatpush1.bf16.msra.mxu0 %v2409
        %2822 = vmatprep.subr.bf16.mxu0 0
        %2823 = vmatpush1.bf16.msra.mxu0 %v2408
        %2824 = vmatprep.subr.bf16.mxu0 0
        %2825 = vmatpush2.bf16.msra.mxu0 %v2423
        %2826 = vmatprep.subr.bf16.mxu0 0
        %2827 = vmatpush2.bf16.msra.mxu0 %v2422
        %2828 = vmatprep.subr.bf16.mxu0 0
        %2829 = vmatpush2.bf16.msra.mxu0 %v2421
        %2830 = vmatprep.subr.bf16.mxu0 0
        %2831 = vmatpush2.bf16.msra.mxu0 %v2420
        %2832 = vmatprep.subr.bf16.mxu0 0
        %2833 = vmatpush2.bf16.msra.mxu0 %v2419
        %2834 = vmatprep.subr.bf16.mxu0 0
        %2835 = vmatpush2.bf16.msra.mxu0 %v2418
        %2836 = vmatprep.subr.bf16.mxu0 0
        %2837 = vmatpush2.bf16.msra.mxu0 %v2417
        %2838 = vmatprep.subr.bf16.mxu0 0
        %2839 = vmatpush2.bf16.msra.mxu0 %v2416
        %2840 = vmatprep.mubr.bf16.mxu0 %v1534
        %2841 = vmatmul.mubr.bf16.gmra.mxu0 %v1533
        %v2842 = vpop.f32.mrf.mxu0
        %v2843 = vadd.f32 %v2803, %v2842
        %v2844 = vpop.f32.mrf.mxu0
        %v2845 = vpop.f32.mrf.mxu0
        %v2846 = vpop.f32.mrf.mxu0
        %2847 = vdwg.mxu0
        %2848 = vmatprep.subr.bf16.mxu0 0
        %2849 = vmatpush1.bf16.msra.mxu0 %v2431
        %2850 = vmatprep.subr.bf16.mxu0 0
        %2851 = vmatpush1.bf16.msra.mxu0 %v2430
        %2852 = vmatprep.subr.bf16.mxu0 0
        %2853 = vmatpush1.bf16.msra.mxu0 %v2429
        %2854 = vmatprep.subr.bf16.mxu0 0
        %2855 = vmatpush1.bf16.msra.mxu0 %v2428
        %2856 = vmatprep.subr.bf16.mxu0 0
        %2857 = vmatpush1.bf16.msra.mxu0 %v2427
        %2858 = vmatprep.subr.bf16.mxu0 0
        %2859 = vmatpush1.bf16.msra.mxu0 %v2426
        %2860 = vmatprep.subr.bf16.mxu0 0
        %2861 = vmatpush1.bf16.msra.mxu0 %v2425
        %2862 = vmatprep.subr.bf16.mxu0 0
        %2863 = vmatpush1.bf16.msra.mxu0 %v2424
        %2864 = vmatprep.subr.bf16.mxu0 0
        %2865 = vmatpush2.bf16.msra.mxu0 %v2439
        %2866 = vmatprep.subr.bf16.mxu0 0
        %2867 = vmatpush2.bf16.msra.mxu0 %v2438
        %2868 = vmatprep.subr.bf16.mxu0 0
        %2869 = vmatpush2.bf16.msra.mxu0 %v2437
        %2870 = vmatprep.subr.bf16.mxu0 0
        %2871 = vmatpush2.bf16.msra.mxu0 %v2436
        %2872 = vmatprep.subr.bf16.mxu0 0
        %2873 = vmatpush2.bf16.msra.mxu0 %v2435
        %2874 = vmatprep.subr.bf16.mxu0 0
        %2875 = vmatpush2.bf16.msra.mxu0 %v2434
        %2876 = vmatprep.subr.bf16.mxu0 0
        %2877 = vmatpush2.bf16.msra.mxu0 %v2433
        %2878 = vmatprep.subr.bf16.mxu0 0
        %2879 = vmatpush2.bf16.msra.mxu0 %v2432
        %2880 = vmatprep.mubr.bf16.mxu0 %v1536
        %2881 = vmatmul.mubr.bf16.gmra.mxu0 %v1535
        %v2882 = vpop.f32.mrf.mxu0
        %v2883 = vadd.f32 %v2843, %v2882
        %v2884 = vpop.f32.mrf.mxu0
        %v2885 = vpop.f32.mrf.mxu0
        %v2886 = vpop.f32.mrf.mxu0
        %2887 = vdwg.mxu0
        %2888 = vst [vmem:[%s319] sm:$0xff] %v2883
        %s2889 = sand.u32 %s171, 1
        %s2890 = scalar_lea.sflag [#allocation6], %s2889
        %s2891 = sand.u32 %s171, 1
        %s2892 = smul.addr %s2891, 8
        %s2893 = scalar_lea.vmem [#allocation12], %s2892
        // Predicated region
        $region57: #{tpu_custom_call.1} parent=39 // pred_check
          %p2894 = pneg %p181
        $region58: #{tpu_custom_call.1} parent=39 // pred_check_branch
          %2896 = sbr.rel (%p2894) target = $region60
        $region59: #{tpu_custom_call.1} parent=39 // pred_region
          %s2898 = ssub.s32 128, 128
          %2899 = vsyncadd %s2890, %s2898
          %s2900 = smul.addr %s30, 128
          %s2901 = scalar_lea.hbm %s6, %s2900
          %s2903 = sshll.u32 %s2893, 4
          %s2904 = int_to_ptr.vmem [resolvable:$true] %s2903
          %2906 = dma.vmem_to_hbm [thread:$0]  %s2904, 128, %s2901, %s2890
        $region60: #{tpu_custom_call.1} parent=39 // pred_fallthru
          _
      $region40: #{tpu_custom_call.1} parent=5 // pred_fallthru
        _
      %p2907 = scmp.le.s32.totalorder 2, %s21
      // Predicated region
      $region61: #{tpu_custom_call.1} parent=5 // pred_check
        %p2908 = pneg %p2907
      $region62: #{tpu_custom_call.1} parent=5 // pred_check_branch
        %2910 = sbr.rel (%p2908) target = $region64
      $region63: #{tpu_custom_call.1} parent=5 // pred_region
        %s2911 = ssub.s32 %s21, 2
        // Predicated region
        $region65: #{tpu_custom_call.1} parent=63 // pred_check
          %p2912 = pneg %p187
        $region66: #{tpu_custom_call.1} parent=63 // pred_check_branch
          %2914 = sbr.rel (%p2912) target = $region68
        $region67: #{tpu_custom_call.1} parent=63 // pred_region
          %s2915 = sand.u32 %s172, 1
          %s2916 = scalar_lea.sflag [#allocation6], %s2915
          %s2917 = sand.u32 %s172, 1
          %s2918 = smul.addr %s2917, 8
          %s2919 = scalar_lea.vmem [#allocation12], %s2918
          %2920 = dma.done %s2916, 128
        $region68: #{tpu_custom_call.1} parent=63 // pred_fallthru
          _
      $region64: #{tpu_custom_call.1} parent=5 // pred_fallthru
        _
    $region6: #{tpu_custom_call.1} parent=1 // loop_footer
      %s25 = sadd.s32 1, %s21
    $region7: #{tpu_custom_call.1} parent=1 // loop_footer_branch
      %20 = sbr.rel target = $region3
    $region8: #{tpu_custom_call.1} parent=1 // loop_exit
      _
    %2921 = vsyncpa [#allocation5], 1
    %s2922 = scalar_lea.sflag [#allocation5], 1
    %2923 = vsyncpa %s2922, 1
    %2924 = vsyncpa [#allocation8], 1
    %2925 = vsyncpa [#allocation11], 1
    %2926 = vsyncpa [#allocation6], 1
    %s2927 = scalar_lea.sflag [#allocation6], 1
    %2928 = vsyncpa %s2927, 1

</llo_original>
